<compile_context>
chip_gen: v6e
topology: v6e:2x2x1
jax: 0.10.0
libtpu: 0.0.40
codegen_flags: <defaults>
</compile_context>

<pallas_src>
import jax
import jax.numpy as jnp
from jax.experimental import pallas as pl
from jax.experimental.pallas import tpu as pltpu

IN_DIM = 28 * 28  # 784
DIMS = [IN_DIM, 128, 64, 32, 64, 128, IN_DIM]  # layer widths
OUT_DIMS = DIMS[1:]


def _round_up(n, m):
    return (n + m - 1) // m * m


def _autoencoder_kernel(x_ref,
                        w1_ref, w2_ref, w3_ref, w4_ref, w5_ref, w6_ref,
                        b_ref, o_ref):
    """One (TILE_B, 784) batch tile through all six fused Linear layers."""
    w_refs = (w1_ref, w2_ref, w3_ref, w4_ref, w5_ref, w6_ref)

    h = x_ref[...]
    for layer, (w_ref, out_dim) in enumerate(zip(w_refs, OUT_DIMS)):
        b = b_ref[layer:layer + 1, :out_dim]           # (1, out_dim), broadcasts over rows
        y = jnp.dot(h.astype(w_ref.dtype), w_ref[...],
                    preferred_element_type=jnp.float32) + b
        if layer < 5:
            h = jnp.maximum(y, 0.0)                    # ReLU
        else:
            # sigmoid: exp on EUP + approximate reciprocal on EUP (VALU stays free).
            e = jnp.exp(-y)
            h = pl.reciprocal(1.0 + e, approx=True)
    o_ref[...] = h.astype(o_ref.dtype)


def autoencoder_forward(x, params, *, tile_b=512, use_bf16=False):
    """x: (B, 784) float32.  params: list of 6 (W_t, b) with W_t shaped (in, out)."""
    B = x.shape[0]
    # Batch tile: multiple of 8 (sublanes), clamped to the (padded) batch size.
    tile_b = max(8, min(tile_b, _round_up(B, 8)))
    tile_b = _round_up(tile_b, 8)
    B_pad = _round_up(B, tile_b)
    if B_pad != B:
        x = jnp.pad(x, ((0, B_pad - B), (0, 0)))

    # Weights (optionally bf16 for the two 784-wide layers) + biases packed into one array.
    ws = []
    b_packed = jnp.zeros((8, IN_DIM), jnp.float32)
    for i, (w, b) in enumerate(params):
        if use_bf16 and i in (0, 5):
            w = w.astype(jnp.bfloat16)
        else:
            w = w.astype(jnp.float32)
        ws.append(w)
        b_packed = b_packed.at[i, :b.shape[0]].set(b.astype(jnp.float32))

    x = x.astype(jnp.bfloat16 if use_bf16 else jnp.float32)

    grid = (B_pad // tile_b,)

    # x streams through the grid; weights / biases are resident (constant index_map).
    in_specs = [pl.BlockSpec((tile_b, IN_DIM), lambda i: (i, 0))]
    for w in ws:
        in_specs.append(pl.BlockSpec(w.shape, lambda i: (0, 0)))
    in_specs.append(pl.BlockSpec(b_packed.shape, lambda i: (0, 0)))

    out_specs = pl.BlockSpec((tile_b, IN_DIM), lambda i: (i, 0))

    flops = B_pad * sum(2 * DIMS[i] * DIMS[i + 1] for i in range(6))
    transcendentals = 2 * B_pad * IN_DIM  # exp + approx reciprocal for the sigmoid
    bytes_accessed = (x.size * x.dtype.itemsize            # input
                      + B_pad * IN_DIM * 4                 # output (f32)
                      + sum(w.size * w.dtype.itemsize for w in ws)
                      + b_packed.size * 4)

    out = pl.pallas_call(
        _autoencoder_kernel,
        grid=grid,
        in_specs=in_specs,
        out_specs=out_specs,
        out_shape=jax.ShapeDtypeStruct((B_pad, IN_DIM), jnp.float32),
        compiler_params=pltpu.CompilerParams(
            dimension_semantics=("parallel",),
            vmem_limit_bytes=32 << 20,
        ),
        cost_estimate=pl.CostEstimate(
            flops=flops,
            transcendentals=transcendentals,
            bytes_accessed=bytes_accessed,
        ),
    )(x, *ws, b_packed)
    return out[:B]


def init_params(key):
    """Deterministic init matching PyTorch Linear shapes (stored transposed)."""
    params = []
    for i in range(6):
        fan_in, fan_out = DIMS[i], DIMS[i + 1]
        key, kw, kb = jax.random.split(key, 3)
        bound = 1.0 / jnp.sqrt(fan_in)
        # PyTorch weight is (out, in); we store (in, out) so kernel does x @ W.
        w = jax.random.uniform(kw, (fan_in, fan_out), jnp.float32, -bound, bound)
        b = jax.random.uniform(kb, (fan_out,), jnp.float32, -bound, bound)
        params.append((w, b))
    return params


def reference_forward(x, params):
    h = x
    for i, (w, b) in enumerate(params):
        h = h @ w + b
        h = jnp.maximum(h, 0.0) if i < 5 else jax.nn.sigmoid(h)
    return h


if __name__ == "__main__":
    key = jax.random.PRNGKey(0)
    key, kx = jax.random.split(key)
    B = 50  # deliberately not a multiple of the tile to exercise padding + multi-step grid
    x = jax.random.normal(kx, (B, IN_DIM), jnp.float32)
    params = init_params(key)

    ref = reference_forward(x, params)

    # f32 path (small tile here so the demo actually runs several grid steps).
    out_f32 = jax.block_until_ready(autoencoder_forward(x, params, tile_b=16))
    assert out_f32.shape == (B, IN_DIM), out_f32.shape
    # tolerance loosened slightly vs 1e-5 because the sigmoid uses the EUP approx reciprocal
    assert jnp.allclose(out_f32, ref, atol=5e-3, rtol=5e-3), float(jnp.max(jnp.abs(out_f32 - ref)))

    # bf16 path for the two 784-wide matmuls (f32 accumulation).
    out_bf16 = jax.block_until_ready(autoencoder_forward(x, params, tile_b=16, use_bf16=True))
    assert out_bf16.shape == (B, IN_DIM), out_bf16.shape
    assert jnp.allclose(out_bf16, ref, atol=3e-2, rtol=3e-2), float(jnp.max(jnp.abs(out_bf16 - ref)))

    print("KERNEL_OK")
</pallas_src>

<mosaic_0001>
module attributes {stable_mosaic.version = 11 : i64} {
  func.func @_autoencoder_kernel(%arg0: i32, %arg1: memref<16x784xf32, #tpu.memory_space<vmem>>, %arg2: memref<784x128xf32, #tpu.memory_space<vmem>>, %arg3: memref<128x64xf32, #tpu.memory_space<vmem>>, %arg4: memref<64x32xf32, #tpu.memory_space<vmem>>, %arg5: memref<32x64xf32, #tpu.memory_space<vmem>>, %arg6: memref<64x128xf32, #tpu.memory_space<vmem>>, %arg7: memref<128x784xf32, #tpu.memory_space<vmem>>, %arg8: memref<8x784xf32, #tpu.memory_space<vmem>>, %arg9: memref<16x784xf32, #tpu.memory_space<vmem>>) attributes {dimension_semantics = [#tpu.dimension_semantics<parallel>], iteration_bounds = array<i64: 4>, scalar_prefetch = 0 : i64, scratch_operands = 0 : i64, tpu.core_type = #tpu.core_type<tc>, window_params = [{transform_indices = @transform_0, window_bounds = array<i64: 16, 784>}, {pipeline_mode = #tpu.pipeline_mode<synchronous>, transform_indices = @transform_1, window_bounds = array<i64: 784, 128>}, {pipeline_mode = #tpu.pipeline_mode<synchronous>, transform_indices = @transform_2, window_bounds = array<i64: 128, 64>}, {pipeline_mode = #tpu.pipeline_mode<synchronous>, transform_indices = @transform_3, window_bounds = array<i64: 64, 32>}, {pipeline_mode = #tpu.pipeline_mode<synchronous>, transform_indices = @transform_4, window_bounds = array<i64: 32, 64>}, {pipeline_mode = #tpu.pipeline_mode<synchronous>, transform_indices = @transform_5, window_bounds = array<i64: 64, 128>}, {pipeline_mode = #tpu.pipeline_mode<synchronous>, transform_indices = @transform_6, window_bounds = array<i64: 128, 784>}, {pipeline_mode = #tpu.pipeline_mode<synchronous>, transform_indices = @transform_7, window_bounds = array<i64: 8, 784>}, {transform_indices = @transform_8, window_bounds = array<i64: 16, 784>}]} {
    %c0 = arith.constant 0 : index
    %c0_0 = arith.constant 0 : index
    %0 = vector.load %arg1[%c0, %c0_0] : memref<16x784xf32, #tpu.memory_space<vmem>>, vector<16x784xf32>
    %c0_1 = arith.constant 0 : index
    %c0_2 = arith.constant 0 : index
    %1 = vector.load %arg8[%c0_1, %c0_2] : memref<8x784xf32, #tpu.memory_space<vmem>>, vector<1x128xf32>
    %c0_3 = arith.constant 0 : index
    %c0_4 = arith.constant 0 : index
    %2 = vector.load %arg2[%c0_3, %c0_4] : memref<784x128xf32, #tpu.memory_space<vmem>>, vector<784x128xf32>
    %cst = arith.constant dense<0.000000e+00> : vector<16x128xf32>
    %3 = tpu.matmul %0, %2, %cst {dimension_numbers = #tpu.dot_dimension_numbers<[1], [0], [0], [1], [0, 0, 1, 1], [], []>} : vector<16x784xf32>, vector<784x128xf32>, vector<16x128xf32> -> vector<16x128xf32>
    %4 = vector.broadcast %1 : vector<1x128xf32> to vector<16x128xf32>
    %5 = arith.addf %3, %4 : vector<16x128xf32>
    %cst_5 = arith.constant 0.000000e+00 : f32
    %6 = vector.broadcast %cst_5 : f32 to vector<16x128xf32>
    %7 = arith.maximumf %5, %6 : vector<16x128xf32>
    %c1 = arith.constant 1 : index
    %c0_6 = arith.constant 0 : index
    %8 = vector.load %arg8[%c1, %c0_6] : memref<8x784xf32, #tpu.memory_space<vmem>>, vector<1x64xf32>
    %c0_7 = arith.constant 0 : index
    %c0_8 = arith.constant 0 : index
    %9 = vector.load %arg3[%c0_7, %c0_8] : memref<128x64xf32, #tpu.memory_space<vmem>>, vector<128x64xf32>
    %cst_9 = arith.constant dense<0.000000e+00> : vector<16x64xf32>
    %10 = tpu.matmul %7, %9, %cst_9 {dimension_numbers = #tpu.dot_dimension_numbers<[1], [0], [0], [1], [0, 0, 1, 1], [], []>} : vector<16x128xf32>, vector<128x64xf32>, vector<16x64xf32> -> vector<16x64xf32>
    %11 = vector.broadcast %8 : vector<1x64xf32> to vector<16x64xf32>
    %12 = arith.addf %10, %11 : vector<16x64xf32>
    %cst_10 = arith.constant 0.000000e+00 : f32
    %13 = vector.broadcast %cst_10 : f32 to vector<16x64xf32>
    %14 = arith.maximumf %12, %13 : vector<16x64xf32>
    %c2 = arith.constant 2 : index
    %c0_11 = arith.constant 0 : index
    %15 = vector.load %arg8[%c2, %c0_11] : memref<8x784xf32, #tpu.memory_space<vmem>>, vector<1x32xf32>
    %c0_12 = arith.constant 0 : index
    %c0_13 = arith.constant 0 : index
    %16 = vector.load %arg4[%c0_12, %c0_13] : memref<64x32xf32, #tpu.memory_space<vmem>>, vector<64x32xf32>
    %cst_14 = arith.constant dense<0.000000e+00> : vector<16x32xf32>
    %17 = tpu.matmul %14, %16, %cst_14 {dimension_numbers = #tpu.dot_dimension_numbers<[1], [0], [0], [1], [0, 0, 1, 1], [], []>} : vector<16x64xf32>, vector<64x32xf32>, vector<16x32xf32> -> vector<16x32xf32>
    %18 = vector.broadcast %15 : vector<1x32xf32> to vector<16x32xf32>
    %19 = arith.addf %17, %18 : vector<16x32xf32>
    %cst_15 = arith.constant 0.000000e+00 : f32
    %20 = vector.broadcast %cst_15 : f32 to vector<16x32xf32>
    %21 = arith.maximumf %19, %20 : vector<16x32xf32>
    %c3 = arith.constant 3 : index
    %c0_16 = arith.constant 0 : index
    %22 = vector.load %arg8[%c3, %c0_16] : memref<8x784xf32, #tpu.memory_space<vmem>>, vector<1x64xf32>
    %c0_17 = arith.constant 0 : index
    %c0_18 = arith.constant 0 : index
    %23 = vector.load %arg5[%c0_17, %c0_18] : memref<32x64xf32, #tpu.memory_space<vmem>>, vector<32x64xf32>
    %cst_19 = arith.constant dense<0.000000e+00> : vector<16x64xf32>
    %24 = tpu.matmul %21, %23, %cst_19 {dimension_numbers = #tpu.dot_dimension_numbers<[1], [0], [0], [1], [0, 0, 1, 1], [], []>} : vector<16x32xf32>, vector<32x64xf32>, vector<16x64xf32> -> vector<16x64xf32>
    %25 = vector.broadcast %22 : vector<1x64xf32> to vector<16x64xf32>
    %26 = arith.addf %24, %25 : vector<16x64xf32>
    %cst_20 = arith.constant 0.000000e+00 : f32
    %27 = vector.broadcast %cst_20 : f32 to vector<16x64xf32>
    %28 = arith.maximumf %26, %27 : vector<16x64xf32>
    %c4 = arith.constant 4 : index
    %c0_21 = arith.constant 0 : index
    %29 = vector.load %arg8[%c4, %c0_21] : memref<8x784xf32, #tpu.memory_space<vmem>>, vector<1x128xf32>
    %c0_22 = arith.constant 0 : index
    %c0_23 = arith.constant 0 : index
    %30 = vector.load %arg6[%c0_22, %c0_23] : memref<64x128xf32, #tpu.memory_space<vmem>>, vector<64x128xf32>
    %cst_24 = arith.constant dense<0.000000e+00> : vector<16x128xf32>
    %31 = tpu.matmul %28, %30, %cst_24 {dimension_numbers = #tpu.dot_dimension_numbers<[1], [0], [0], [1], [0, 0, 1, 1], [], []>} : vector<16x64xf32>, vector<64x128xf32>, vector<16x128xf32> -> vector<16x128xf32>
    %32 = vector.broadcast %29 : vector<1x128xf32> to vector<16x128xf32>
    %33 = arith.addf %31, %32 : vector<16x128xf32>
    %cst_25 = arith.constant 0.000000e+00 : f32
    %34 = vector.broadcast %cst_25 : f32 to vector<16x128xf32>
    %35 = arith.maximumf %33, %34 : vector<16x128xf32>
    %c5 = arith.constant 5 : index
    %c0_26 = arith.constant 0 : index
    %36 = vector.load %arg8[%c5, %c0_26] : memref<8x784xf32, #tpu.memory_space<vmem>>, vector<1x784xf32>
    %c0_27 = arith.constant 0 : index
    %c0_28 = arith.constant 0 : index
    %37 = vector.load %arg7[%c0_27, %c0_28] : memref<128x784xf32, #tpu.memory_space<vmem>>, vector<128x784xf32>
    %cst_29 = arith.constant dense<0.000000e+00> : vector<16x784xf32>
    %38 = tpu.matmul %35, %37, %cst_29 {dimension_numbers = #tpu.dot_dimension_numbers<[1], [0], [0], [1], [0, 0, 1, 1], [], []>} : vector<16x128xf32>, vector<128x784xf32>, vector<16x784xf32> -> vector<16x784xf32>
    %39 = vector.broadcast %36 : vector<1x784xf32> to vector<16x784xf32>
    %40 = arith.addf %38, %39 : vector<16x784xf32>
    %cst_30 = arith.constant 0.000000e+00 : f32
    %41 = vector.broadcast %cst_30 : f32 to vector<16x784xf32>
    %42 = arith.subf %41, %40 : vector<16x784xf32>
    %43 = math.exp %42 : vector<16x784xf32>
    %cst_31 = arith.constant 1.000000e+00 : f32
    %44 = vector.broadcast %cst_31 : f32 to vector<16x784xf32>
    %45 = arith.addf %44, %43 : vector<16x784xf32>
    %46 = tpu.reciprocal %45 {approx = true} : vector<16x784xf32> -> vector<16x784xf32>
    %c0_32 = arith.constant 0 : index
    %c0_33 = arith.constant 0 : index
    %47 = vector.load %arg9[%c0_32, %c0_33] : memref<16x784xf32, #tpu.memory_space<vmem>>, vector<16x784xf32>
    tpu.vector_store %arg9[%c0_32, %c0_33], %46 {strides = array<i32>} : memref<16x784xf32, #tpu.memory_space<vmem>>, vector<16x784xf32>,
    return
  }
  func.func @transform_0(%arg0: i32) -> (i32, i32) {
    %c0_i32 = arith.constant 0 : i32
    %c0_i32_0 = arith.constant 0 : i32
    return %arg0, %c0_i32 : i32, i32
  }
  func.func @transform_1(%arg0: i32) -> (i32, i32) {
    %c0_i32 = arith.constant 0 : i32
    %c0_i32_0 = arith.constant 0 : i32
    %c0_i32_1 = arith.constant 0 : i32
    return %c0_i32, %c0_i32_0 : i32, i32
  }
  func.func @transform_2(%arg0: i32) -> (i32, i32) {
    %c0_i32 = arith.constant 0 : i32
    %c0_i32_0 = arith.constant 0 : i32
    %c0_i32_1 = arith.constant 0 : i32
    return %c0_i32, %c0_i32_0 : i32, i32
  }
  func.func @transform_3(%arg0: i32) -> (i32, i32) {
    %c0_i32 = arith.constant 0 : i32
    %c0_i32_0 = arith.constant 0 : i32
    %c0_i32_1 = arith.constant 0 : i32
    return %c0_i32, %c0_i32_0 : i32, i32
  }
  func.func @transform_4(%arg0: i32) -> (i32, i32) {
    %c0_i32 = arith.constant 0 : i32
    %c0_i32_0 = arith.constant 0 : i32
    %c0_i32_1 = arith.constant 0 : i32
    return %c0_i32, %c0_i32_0 : i32, i32
  }
  func.func @transform_5(%arg0: i32) -> (i32, i32) {
    %c0_i32 = arith.constant 0 : i32
    %c0_i32_0 = arith.constant 0 : i32
    %c0_i32_1 = arith.constant 0 : i32
    return %c0_i32, %c0_i32_0 : i32, i32
  }
  func.func @transform_6(%arg0: i32) -> (i32, i32) {
    %c0_i32 = arith.constant 0 : i32
    %c0_i32_0 = arith.constant 0 : i32
    %c0_i32_1 = arith.constant 0 : i32
    return %c0_i32, %c0_i32_0 : i32, i32
  }
  func.func @transform_7(%arg0: i32) -> (i32, i32) {
    %c0_i32 = arith.constant 0 : i32
    %c0_i32_0 = arith.constant 0 : i32
    %c0_i32_1 = arith.constant 0 : i32
    return %c0_i32, %c0_i32_0 : i32, i32
  }
  func.func @transform_8(%arg0: i32) -> (i32, i32) {
    %c0_i32 = arith.constant 0 : i32
    %c0_i32_0 = arith.constant 0 : i32
    return %arg0, %c0_i32 : i32, i32
  }
}

</mosaic_0001>

<llo_original>
// kernel: tpu_custom_call.1
$region0: #{tpu_custom_call.1}
  #allocation0 [shape = 'u32[]', space=smem, size = 0x4, offset = 0x4, fixed_abs, tag = 'smem constant byte address 0x4 - core index']
  #allocation1 [shape = 'u32[144,128]{1,0:T(1,128)}', space=vmem, size = 0x12000, scoped, tag = 'internal scratch']
  %s0 = inlined_call_operand.vmem [shape: f32[64,784], index: 0, kind: input, shape index: {}]
  %s1 = inlined_call_operand.vmem [shape: f32[784,128], index: 1, kind: input, shape index: {}]
  %s2 = inlined_call_operand.vmem [shape: f32[128,64], index: 2, kind: input, shape index: {}]
  %s3 = inlined_call_operand.vmem [shape: f32[64,32], index: 3, kind: input, shape index: {}]
  %s4 = inlined_call_operand.vmem [shape: f32[32,64], index: 4, kind: input, shape index: {}]
  %s5 = inlined_call_operand.vmem [shape: f32[64,128], index: 5, kind: input, shape index: {}]
  %s6 = inlined_call_operand.vmem [shape: f32[128,784], index: 6, kind: input, shape index: {}]
  %s7 = inlined_call_operand.vmem [shape: f32[8,784], index: 7, kind: input, shape index: {}]
  %s8 = inlined_call_operand.hbm [shape: f32[64,784], index: 8, kind: output, shape index: {}]
  %s9 = sld [smem:[#allocation0]]
  $region65: #{tpu_custom_call.1} parent=0
    _
  %s11 = ssub.s32 1, %s9
  %s12 = scalar_select 0, %s11, %s9
  $region1: #{tpu_custom_call.1} parent=0
    #allocation2 [shape = 'u8[114688]{0}', space=vmem, size = 0x1c000, scoped, tag = 'output window, operand 0']
    #allocation3 [shape = 's32[2]{0}', space=sflag, size = 0x8, scoped, tag = 'scoped memory for tpu_custom_call.1']
    %13 = vsyncpa [#allocation3], 0
    %s14 = scalar_lea.sflag [#allocation3], 1
    %15 = vsyncpa %s14, 0
    loop: start=0, step=1, limit=6
    $region2: #{tpu_custom_call.1} parent=1 // loop_pre_header
      _
    $region3: #{tpu_custom_call.1} parent=1 // loop_header
      %s17 = sphi 0, %s21
      %p18 = scmp.ge.s32.totalorder %s17, 6
      %s27 = sphi 0, %s29
      %s30 = sphi 0, %s27
      %s31 = sphi 0, %s30
      %s47 = sphi 0, %s31
      %s51 = sphi 0, %s51
      %s53 = sphi 0, %s51
      %s54 = sphi 0, %s53
      %s68 = sphi 0, %s54
      %s72 = sphi 0, %s72
      %s74 = sphi 0, %s72
      %s75 = sphi 0, %s74
      %s89 = sphi 0, %s75
      %s93 = sphi 0, %s93
      %s95 = sphi 0, %s93
      %s96 = sphi 0, %s95
      %s110 = sphi 0, %s96
      %s114 = sphi 0, %s114
      %s116 = sphi 0, %s114
      %s117 = sphi 0, %s116
      %s131 = sphi 0, %s117
      %s135 = sphi 0, %s135
      %s137 = sphi 0, %s135
      %s138 = sphi 0, %s137
      %s152 = sphi 0, %s138
      %s156 = sphi 0, %s156
      %s158 = sphi 0, %s156
      %s159 = sphi 0, %s158
      %s173 = sphi 0, %s159
      %s177 = sphi 0, %s177
      %s179 = sphi 0, %s177
      %s180 = sphi 0, %s179
      %s194 = sphi 0, %s180
      %s200 = sphi 0, %s202
      %s203 = sphi 0, %s200
      %s204 = sphi 0, %s203
      %s220 = sphi 0, %s204
    $region4: #{tpu_custom_call.1} parent=1 // loop_header_branch
      %20 = sbr.rel (%p18) target = $region8
    $region5: #{tpu_custom_call.1} parent=1 // loop_body
      %s22 = ssub.s32 %s17, 1
      %s23 = ssub.s32 %s17, 2
      %s24 = sadd.s32 %s17, 1
      %s25 = ssub.s32 %s17, %s24
      %p26 = scmp.eq.s32.totalorder %s25, 0
      %s28 = sadd.s32 %s27, 1
      %s29 = scalar_select %p26, %s27, %s28
      %p32 = pneg %p26
      %p33 = scmp.eq.s32.totalorder %s17, 3
      %p34 = por %p32, %p33
      %p35 = scmp.ne.s32.totalorder %s27, %s30
      %p36 = scmp.eq.s32.totalorder %s17, 0
      %p37 = por %p35, %p36
      %p38 = scmp.ne.s32.totalorder %s27, %s30
      %p39 = scmp.eq.s32.totalorder %s22, 3
      %p40 = por %p38, %p39
      %p41 = scmp.ne.s32.totalorder %s30, %s31
      %p42 = scmp.eq.s32.totalorder %s22, 0
      %p43 = por %p41, %p42
      %p44 = scmp.ne.s32.totalorder %s30, %s31
      %p45 = scmp.eq.s32.totalorder %s23, 3
      %p46 = por %p44, %p45
      %p48 = scmp.ne.s32.totalorder %s31, %s47
      %p49 = scmp.eq.s32.totalorder %s23, 0
      %p50 = por %p48, %p49
      %s52 = sadd.s32 %s51, 1
      %p55 = scmp.eq.s32.totalorder %s17, 3
      %p56 = scmp.ne.s32.totalorder %s51, %s53
      %p57 = scmp.eq.s32.totalorder %s17, 0
      %p58 = por %p56, %p57
      %p59 = scmp.ne.s32.totalorder %s51, %s53
      %p60 = scmp.eq.s32.totalorder %s22, 3
      %p61 = por %p59, %p60
      %p62 = scmp.ne.s32.totalorder %s53, %s54
      %p63 = scmp.eq.s32.totalorder %s22, 0
      %p64 = por %p62, %p63
      %p65 = scmp.ne.s32.totalorder %s53, %s54
      %p66 = scmp.eq.s32.totalorder %s23, 3
      %p67 = por %p65, %p66
      %p69 = scmp.ne.s32.totalorder %s54, %s68
      %p70 = scmp.eq.s32.totalorder %s23, 0
      %p71 = por %p69, %p70
      %s73 = sadd.s32 %s72, 1
      %p76 = scmp.eq.s32.totalorder %s17, 3
      %p77 = scmp.ne.s32.totalorder %s72, %s74
      %p78 = scmp.eq.s32.totalorder %s17, 0
      %p79 = por %p77, %p78
      %p80 = scmp.ne.s32.totalorder %s72, %s74
      %p81 = scmp.eq.s32.totalorder %s22, 3
      %p82 = por %p80, %p81
      %p83 = scmp.ne.s32.totalorder %s74, %s75
      %p84 = scmp.eq.s32.totalorder %s22, 0
      %p85 = por %p83, %p84
      %p86 = scmp.ne.s32.totalorder %s74, %s75
      %p87 = scmp.eq.s32.totalorder %s23, 3
      %p88 = por %p86, %p87
      %p90 = scmp.ne.s32.totalorder %s75, %s89
      %p91 = scmp.eq.s32.totalorder %s23, 0
      %p92 = por %p90, %p91
      %s94 = sadd.s32 %s93, 1
      %p97 = scmp.eq.s32.totalorder %s17, 3
      %p98 = scmp.ne.s32.totalorder %s93, %s95
      %p99 = scmp.eq.s32.totalorder %s17, 0
      %p100 = por %p98, %p99
      %p101 = scmp.ne.s32.totalorder %s93, %s95
      %p102 = scmp.eq.s32.totalorder %s22, 3
      %p103 = por %p101, %p102
      %p104 = scmp.ne.s32.totalorder %s95, %s96
      %p105 = scmp.eq.s32.totalorder %s22, 0
      %p106 = por %p104, %p105
      %p107 = scmp.ne.s32.totalorder %s95, %s96
      %p108 = scmp.eq.s32.totalorder %s23, 3
      %p109 = por %p107, %p108
      %p111 = scmp.ne.s32.totalorder %s96, %s110
      %p112 = scmp.eq.s32.totalorder %s23, 0
      %p113 = por %p111, %p112
      %s115 = sadd.s32 %s114, 1
      %p118 = scmp.eq.s32.totalorder %s17, 3
      %p119 = scmp.ne.s32.totalorder %s114, %s116
      %p120 = scmp.eq.s32.totalorder %s17, 0
      %p121 = por %p119, %p120
      %p122 = scmp.ne.s32.totalorder %s114, %s116
      %p123 = scmp.eq.s32.totalorder %s22, 3
      %p124 = por %p122, %p123
      %p125 = scmp.ne.s32.totalorder %s116, %s117
      %p126 = scmp.eq.s32.totalorder %s22, 0
      %p127 = por %p125, %p126
      %p128 = scmp.ne.s32.totalorder %s116, %s117
      %p129 = scmp.eq.s32.totalorder %s23, 3
      %p130 = por %p128, %p129
      %p132 = scmp.ne.s32.totalorder %s117, %s131
      %p133 = scmp.eq.s32.totalorder %s23, 0
      %p134 = por %p132, %p133
      %s136 = sadd.s32 %s135, 1
      %p139 = scmp.eq.s32.totalorder %s17, 3
      %p140 = scmp.ne.s32.totalorder %s135, %s137
      %p141 = scmp.eq.s32.totalorder %s17, 0
      %p142 = por %p140, %p141
      %p143 = scmp.ne.s32.totalorder %s135, %s137
      %p144 = scmp.eq.s32.totalorder %s22, 3
      %p145 = por %p143, %p144
      %p146 = scmp.ne.s32.totalorder %s137, %s138
      %p147 = scmp.eq.s32.totalorder %s22, 0
      %p148 = por %p146, %p147
      %p149 = scmp.ne.s32.totalorder %s137, %s138
      %p150 = scmp.eq.s32.totalorder %s23, 3
      %p151 = por %p149, %p150
      %p153 = scmp.ne.s32.totalorder %s138, %s152
      %p154 = scmp.eq.s32.totalorder %s23, 0
      %p155 = por %p153, %p154
      %s157 = sadd.s32 %s156, 1
      %p160 = scmp.eq.s32.totalorder %s17, 3
      %p161 = scmp.ne.s32.totalorder %s156, %s158
      %p162 = scmp.eq.s32.totalorder %s17, 0
      %p163 = por %p161, %p162
      %p164 = scmp.ne.s32.totalorder %s156, %s158
      %p165 = scmp.eq.s32.totalorder %s22, 3
      %p166 = por %p164, %p165
      %p167 = scmp.ne.s32.totalorder %s158, %s159
      %p168 = scmp.eq.s32.totalorder %s22, 0
      %p169 = por %p167, %p168
      %p170 = scmp.ne.s32.totalorder %s158, %s159
      %p171 = scmp.eq.s32.totalorder %s23, 3
      %p172 = por %p170, %p171
      %p174 = scmp.ne.s32.totalorder %s159, %s173
      %p175 = scmp.eq.s32.totalorder %s23, 0
      %p176 = por %p174, %p175
      %s178 = sadd.s32 %s177, 1
      %p181 = scmp.eq.s32.totalorder %s17, 3
      %p182 = scmp.ne.s32.totalorder %s177, %s179
      %p183 = scmp.eq.s32.totalorder %s17, 0
      %p184 = por %p182, %p183
      %p185 = scmp.ne.s32.totalorder %s177, %s179
      %p186 = scmp.eq.s32.totalorder %s22, 3
      %p187 = por %p185, %p186
      %p188 = scmp.ne.s32.totalorder %s179, %s180
      %p189 = scmp.eq.s32.totalorder %s22, 0
      %p190 = por %p188, %p189
      %p191 = scmp.ne.s32.totalorder %s179, %s180
      %p192 = scmp.eq.s32.totalorder %s23, 3
      %p193 = por %p191, %p192
      %p195 = scmp.ne.s32.totalorder %s180, %s194
      %p196 = scmp.eq.s32.totalorder %s23, 0
      %p197 = por %p195, %p196
      %s198 = ssub.s32 %s17, %s24
      %p199 = scmp.eq.s32.totalorder %s198, 0
      %s201 = sadd.s32 %s200, 1
      %s202 = scalar_select %p199, %s200, %s201
      %p205 = pneg %p199
      %p206 = scmp.eq.s32.totalorder %s17, 3
      %p207 = por %p205, %p206
      %p208 = scmp.ne.s32.totalorder %s200, %s203
      %p209 = scmp.eq.s32.totalorder %s17, 0
      %p210 = por %p208, %p209
      %p211 = scmp.ne.s32.totalorder %s200, %s203
      %p212 = scmp.eq.s32.totalorder %s22, 3
      %p213 = por %p211, %p212
      %p214 = scmp.ne.s32.totalorder %s203, %s204
      %p215 = scmp.eq.s32.totalorder %s22, 0
      %p216 = por %p214, %p215
      %p217 = scmp.ne.s32.totalorder %s203, %s204
      %p218 = scmp.eq.s32.totalorder %s23, 3
      %p219 = por %p217, %p218
      %p221 = scmp.ne.s32.totalorder %s204, %s220
      %p222 = scmp.eq.s32.totalorder %s23, 0
      %p223 = por %p221, %p222
      %p224 = scmp.le.s32.totalorder 1, %s17
      %p225 = scmp.lt.s32.totalorder %s17, 5
      %p226 = pnand %p224, %p225
      %p227 = pneg %p226
      // Predicated region
      $region9: #{tpu_custom_call.1} parent=5 // pred_check
        _
      $region10: #{tpu_custom_call.1} parent=5 // pred_check_branch
        %229 = sbr.rel (%p226) target = $region12
      $region11: #{tpu_custom_call.1} parent=5 // pred_region
        %s230 = ssub.s32 %s17, 1
        // Predicated region
        $region13: #{tpu_custom_call.1} parent=11 // pred_check
          %p231 = pneg %p64
        $region14: #{tpu_custom_call.1} parent=11 // pred_check_branch
          %233 = sbr.rel (%p231) target = $region16
        $region15: #{tpu_custom_call.1} parent=11 // pred_region
          _
        $region16: #{tpu_custom_call.1} parent=11 // pred_fallthru
          _
        // Predicated region
        $region17: #{tpu_custom_call.1} parent=11 // pred_check
          %p234 = pneg %p85
        $region18: #{tpu_custom_call.1} parent=11 // pred_check_branch
          %236 = sbr.rel (%p234) target = $region20
        $region19: #{tpu_custom_call.1} parent=11 // pred_region
          _
        $region20: #{tpu_custom_call.1} parent=11 // pred_fallthru
          _
        // Predicated region
        $region21: #{tpu_custom_call.1} parent=11 // pred_check
          %p237 = pneg %p106
        $region22: #{tpu_custom_call.1} parent=11 // pred_check_branch
          %239 = sbr.rel (%p237) target = $region24
        $region23: #{tpu_custom_call.1} parent=11 // pred_region
          _
        $region24: #{tpu_custom_call.1} parent=11 // pred_fallthru
          _
        // Predicated region
        $region25: #{tpu_custom_call.1} parent=11 // pred_check
          %p240 = pneg %p127
        $region26: #{tpu_custom_call.1} parent=11 // pred_check_branch
          %242 = sbr.rel (%p240) target = $region28
        $region27: #{tpu_custom_call.1} parent=11 // pred_region
          _
        $region28: #{tpu_custom_call.1} parent=11 // pred_fallthru
          _
        // Predicated region
        $region29: #{tpu_custom_call.1} parent=11 // pred_check
          %p243 = pneg %p148
        $region30: #{tpu_custom_call.1} parent=11 // pred_check_branch
          %245 = sbr.rel (%p243) target = $region32
        $region31: #{tpu_custom_call.1} parent=11 // pred_region
          _
        $region32: #{tpu_custom_call.1} parent=11 // pred_fallthru
          _
        // Predicated region
        $region33: #{tpu_custom_call.1} parent=11 // pred_check
          %p246 = pneg %p169
        $region34: #{tpu_custom_call.1} parent=11 // pred_check_branch
          %248 = sbr.rel (%p246) target = $region36
        $region35: #{tpu_custom_call.1} parent=11 // pred_region
          _
        $region36: #{tpu_custom_call.1} parent=11 // pred_fallthru
          _
        // Predicated region
        $region37: #{tpu_custom_call.1} parent=11 // pred_check
          %p249 = pneg %p190
        $region38: #{tpu_custom_call.1} parent=11 // pred_check_branch
          %251 = sbr.rel (%p249) target = $region40
        $region39: #{tpu_custom_call.1} parent=11 // pred_region
          _
        $region40: #{tpu_custom_call.1} parent=11 // pred_fallthru
          _
      $region12: #{tpu_custom_call.1} parent=5 // pred_fallthru
        _
      %p252 = scmp.lt.s32.totalorder %s17, 4
      // Predicated region
      $region41: #{tpu_custom_call.1} parent=5 // pred_check
        %p253 = pneg %p252
      $region42: #{tpu_custom_call.1} parent=5 // pred_check_branch
        %255 = sbr.rel (%p253) target = $region44
      $region43: #{tpu_custom_call.1} parent=5 // pred_region
        // Predicated region
        $region45: #{tpu_custom_call.1} parent=43 // pred_check
          %p256 = pneg %p37
        $region46: #{tpu_custom_call.1} parent=43 // pred_check_branch
          %258 = sbr.rel (%p256) target = $region48
        $region47: #{tpu_custom_call.1} parent=43 // pred_region
          %s259 = smul.u32 2, %s17
          %p260 = scmp.lt.s32.totalorder %s259, 7
          %s261 = scalar_select %p260, %s259, 7
          %s262 = smul.addr %s261, 7
          %s263 = smul.addr %s262, 8
          %s264 = scalar_lea.vmem %s0, %s263
          %s265 = smul.u32 2, %s17
        $region48: #{tpu_custom_call.1} parent=43 // pred_fallthru
          _
      $region44: #{tpu_custom_call.1} parent=5 // pred_fallthru
        _
      %p266 = scmp.le.s32.totalorder 1, %s17
      %p267 = scmp.lt.s32.totalorder %s17, 5
      %p268 = pnand %p266, %p267
      %p269 = pneg %p268
      // Predicated region
      $region49: #{tpu_custom_call.1} parent=5 // pred_check
        _
      $region50: #{tpu_custom_call.1} parent=5 // pred_check_branch
        %271 = sbr.rel (%p268) target = $region52
      $region51: #{tpu_custom_call.1} parent=5 // pred_region
        %s272 = ssub.s32 %s17, 1
        %s273 = smul.u32 2, %s22
        %p274 = scmp.lt.s32.totalorder %s273, 7
        %s275 = scalar_select %p274, %s273, 7
        %s276 = smul.addr %s275, 7
        %s277 = smul.addr %s276, 8
        %s278 = scalar_lea.vmem %s0, %s277
        %p279 = pneg %p43
        %p280 = pneg %p40
        %p281 = pneg %p64
        %p282 = pneg %p61
        %p283 = pneg %p85
        %p284 = pneg %p82
        %p285 = pneg %p106
        %p286 = pneg %p103
        %p287 = pneg %p127
        %p288 = pneg %p124
        %p289 = pneg %p148
        %p290 = pneg %p145
        %p291 = pneg %p169
        %p292 = pneg %p166
        %p293 = pneg %p190
        %p294 = pneg %p187
        %p295 = pneg %p216
        %p296 = pneg %p213
        %s297 = sand.u32 %s203, 1
        %s298 = scalar_lea.sflag [#allocation3], %s297
        %s299 = sand.u32 %s203, 1
        %s300 = smul.addr %s299, 112
        %s301 = scalar_lea.vmem [#allocation2], %s300
        %s302 = smul.u32 2, %s22
        %p303 = scmp.lt.s32.totalorder %s302, 7
        %s304 = scalar_select %p303, %s302, 7
        %s305 = smul.addr %s304, 7
        %s306 = smul.addr %s305, 8
        %s307 = scalar_lea.vmem %s0, %s306
        %s308 = smul.u32 2, %s22
        %s309 = smul.u32 2, %s22
        %v310 = vld [vmem:[%s307] sm:$0xff]
        %v311 = vld [vmem:[%s307 + $0x8] sm:$0xff]
        %v312 = vld [vmem:[%s307 + $0x10] sm:$0xff]
        %v313 = vld [vmem:[%s307 + $0x18] sm:$0xff]
        %v314 = vld [vmem:[%s307 + $0x20] sm:$0xff]
        %v315 = vld [vmem:[%s307 + $0x28] sm:$0xff]
        %v316 = vld [vmem:[%s307 + $0x30] sm:$0xff]
        %v317 = vld [vmem:[%s307 + $0x38] sm:$0xff]
        %v318 = vld [vmem:[%s307 + $0x40] sm:$0xff]
        %v319 = vld [vmem:[%s307 + $0x48] sm:$0xff]
        %v320 = vld [vmem:[%s307 + $0x50] sm:$0xff]
        %v321 = vld [vmem:[%s307 + $0x58] sm:$0xff]
        %v322 = vld [vmem:[%s307 + $0x60] sm:$0xff]
        %v323 = vld [vmem:[%s307 + $0x68] sm:$0xff]
        %v324 = vld [vmem:[%s7] ss:$0 sm:$0xff]
        %v325 = vld [vmem:[%s1] sm:$0xff]
        %v326 = vld [vmem:[%s1 + $0x8] sm:$0xff]
        %v327 = vld [vmem:[%s1 + $0x10] sm:$0xff]
        %v328 = vld [vmem:[%s1 + $0x18] sm:$0xff]
        %v329 = vld [vmem:[%s1 + $0x20] sm:$0xff]
        %v330 = vld [vmem:[%s1 + $0x28] sm:$0xff]
        %v331 = vld [vmem:[%s1 + $0x30] sm:$0xff]
        %v332 = vld [vmem:[%s1 + $0x38] sm:$0xff]
        %v333 = vld [vmem:[%s1 + $0x40] sm:$0xff]
        %v334 = vld [vmem:[%s1 + $0x48] sm:$0xff]
        %v335 = vld [vmem:[%s1 + $0x50] sm:$0xff]
        %v336 = vld [vmem:[%s1 + $0x58] sm:$0xff]
        %v337 = vld [vmem:[%s1 + $0x60] sm:$0xff]
        %v338 = vld [vmem:[%s1 + $0x68] sm:$0xff]
        %v339 = vld [vmem:[%s1 + $0x70] sm:$0xff]
        %v340 = vld [vmem:[%s1 + $0x78] sm:$0xff]
        %v341 = vld [vmem:[%s1 + $0x80] sm:$0xff]
        %v342 = vld [vmem:[%s1 + $0x88] sm:$0xff]
        %v343 = vld [vmem:[%s1 + $0x90] sm:$0xff]
        %v344 = vld [vmem:[%s1 + $0x98] sm:$0xff]
        %v345 = vld [vmem:[%s1 + $0xa0] sm:$0xff]
        %v346 = vld [vmem:[%s1 + $0xa8] sm:$0xff]
        %v347 = vld [vmem:[%s1 + $0xb0] sm:$0xff]
        %v348 = vld [vmem:[%s1 + $0xb8] sm:$0xff]
        %v349 = vld [vmem:[%s1 + $0xc0] sm:$0xff]
        %v350 = vld [vmem:[%s1 + $0xc8] sm:$0xff]
        %v351 = vld [vmem:[%s1 + $0xd0] sm:$0xff]
        %v352 = vld [vmem:[%s1 + $0xd8] sm:$0xff]
        %v353 = vld [vmem:[%s1 + $0xe0] sm:$0xff]
        %v354 = vld [vmem:[%s1 + $0xe8] sm:$0xff]
        %v355 = vld [vmem:[%s1 + $0xf0] sm:$0xff]
        %v356 = vld [vmem:[%s1 + $0xf8] sm:$0xff]
        %v357 = vld [vmem:[%s1 + $0x100] sm:$0xff]
        %v358 = vld [vmem:[%s1 + $0x108] sm:$0xff]
        %v359 = vld [vmem:[%s1 + $0x110] sm:$0xff]
        %v360 = vld [vmem:[%s1 + $0x118] sm:$0xff]
        %v361 = vld [vmem:[%s1 + $0x120] sm:$0xff]
        %v362 = vld [vmem:[%s1 + $0x128] sm:$0xff]
        %v363 = vld [vmem:[%s1 + $0x130] sm:$0xff]
        %v364 = vld [vmem:[%s1 + $0x138] sm:$0xff]
        %v365 = vld [vmem:[%s1 + $0x140] sm:$0xff]
        %v366 = vld [vmem:[%s1 + $0x148] sm:$0xff]
        %v367 = vld [vmem:[%s1 + $0x150] sm:$0xff]
        %v368 = vld [vmem:[%s1 + $0x158] sm:$0xff]
        %v369 = vld [vmem:[%s1 + $0x160] sm:$0xff]
        %v370 = vld [vmem:[%s1 + $0x168] sm:$0xff]
        %v371 = vld [vmem:[%s1 + $0x170] sm:$0xff]
        %v372 = vld [vmem:[%s1 + $0x178] sm:$0xff]
        %v373 = vld [vmem:[%s1 + $0x180] sm:$0xff]
        %v374 = vld [vmem:[%s1 + $0x188] sm:$0xff]
        %v375 = vld [vmem:[%s1 + $0x190] sm:$0xff]
        %v376 = vld [vmem:[%s1 + $0x198] sm:$0xff]
        %v377 = vld [vmem:[%s1 + $0x1a0] sm:$0xff]
        %v378 = vld [vmem:[%s1 + $0x1a8] sm:$0xff]
        %v379 = vld [vmem:[%s1 + $0x1b0] sm:$0xff]
        %v380 = vld [vmem:[%s1 + $0x1b8] sm:$0xff]
        %v381 = vld [vmem:[%s1 + $0x1c0] sm:$0xff]
        %v382 = vld [vmem:[%s1 + $0x1c8] sm:$0xff]
        %v383 = vld [vmem:[%s1 + $0x1d0] sm:$0xff]
        %v384 = vld [vmem:[%s1 + $0x1d8] sm:$0xff]
        %v385 = vld [vmem:[%s1 + $0x1e0] sm:$0xff]
        %v386 = vld [vmem:[%s1 + $0x1e8] sm:$0xff]
        %v387 = vld [vmem:[%s1 + $0x1f0] sm:$0xff]
        %v388 = vld [vmem:[%s1 + $0x1f8] sm:$0xff]
        %v389 = vld [vmem:[%s1 + $0x200] sm:$0xff]
        %v390 = vld [vmem:[%s1 + $0x208] sm:$0xff]
        %v391 = vld [vmem:[%s1 + $0x210] sm:$0xff]
        %v392 = vld [vmem:[%s1 + $0x218] sm:$0xff]
        %v393 = vld [vmem:[%s1 + $0x220] sm:$0xff]
        %v394 = vld [vmem:[%s1 + $0x228] sm:$0xff]
        %v395 = vld [vmem:[%s1 + $0x230] sm:$0xff]
        %v396 = vld [vmem:[%s1 + $0x238] sm:$0xff]
        %v397 = vld [vmem:[%s1 + $0x240] sm:$0xff]
        %v398 = vld [vmem:[%s1 + $0x248] sm:$0xff]
        %v399 = vld [vmem:[%s1 + $0x250] sm:$0xff]
        %v400 = vld [vmem:[%s1 + $0x258] sm:$0xff]
        %v401 = vld [vmem:[%s1 + $0x260] sm:$0xff]
        %v402 = vld [vmem:[%s1 + $0x268] sm:$0xff]
        %v403 = vld [vmem:[%s1 + $0x270] sm:$0xff]
        %v404 = vld [vmem:[%s1 + $0x278] sm:$0xff]
        %v405 = vld [vmem:[%s1 + $0x280] sm:$0xff]
        %v406 = vld [vmem:[%s1 + $0x288] sm:$0xff]
        %v407 = vld [vmem:[%s1 + $0x290] sm:$0xff]
        %v408 = vld [vmem:[%s1 + $0x298] sm:$0xff]
        %v409 = vld [vmem:[%s1 + $0x2a0] sm:$0xff]
        %v410 = vld [vmem:[%s1 + $0x2a8] sm:$0xff]
        %v411 = vld [vmem:[%s1 + $0x2b0] sm:$0xff]
        %v412 = vld [vmem:[%s1 + $0x2b8] sm:$0xff]
        %v413 = vld [vmem:[%s1 + $0x2c0] sm:$0xff]
        %v414 = vld [vmem:[%s1 + $0x2c8] sm:$0xff]
        %v415 = vld [vmem:[%s1 + $0x2d0] sm:$0xff]
        %v416 = vld [vmem:[%s1 + $0x2d8] sm:$0xff]
        %v417 = vld [vmem:[%s1 + $0x2e0] sm:$0xff]
        %v418 = vld [vmem:[%s1 + $0x2e8] sm:$0xff]
        %v419 = vld [vmem:[%s1 + $0x2f0] sm:$0xff]
        %v420 = vld [vmem:[%s1 + $0x2f8] sm:$0xff]
        %v421 = vld [vmem:[%s1 + $0x300] sm:$0xff]
        %v422 = vld [vmem:[%s1 + $0x308] sm:$0xff]
        %vm423 = vcmask 130048
        %v425 = vsel %vm423, %v316, 0
        %v428 = vsel %vm423, %v323, 0
        %430 = vmatprep.subr.mxu0 0.0
        %431 = vmatpush1.msra.mxu0 %v340
        %432 = vmatprep.subr.mxu0 0.0
        %433 = vmatpush1.msra.mxu0 %v339
        %434 = vmatprep.subr.mxu0 0.0
        %435 = vmatpush1.msra.mxu0 %v338
        %436 = vmatprep.subr.mxu0 0.0
        %437 = vmatpush1.msra.mxu0 %v337
        %438 = vmatprep.subr.mxu0 0.0
        %439 = vmatpush1.msra.mxu0 %v336
        %440 = vmatprep.subr.mxu0 0.0
        %441 = vmatpush1.msra.mxu0 %v335
        %442 = vmatprep.subr.mxu0 0.0
        %443 = vmatpush1.msra.mxu0 %v334
        %444 = vmatprep.subr.mxu0 0.0
        %445 = vmatpush1.msra.mxu0 %v333
        %446 = vmatprep.subr.mxu0 0.0
        %447 = vmatpush1.msra.mxu0 %v332
        %448 = vmatprep.subr.mxu0 0.0
        %449 = vmatpush1.msra.mxu0 %v331
        %450 = vmatprep.subr.mxu0 0.0
        %451 = vmatpush1.msra.mxu0 %v330
        %452 = vmatprep.subr.mxu0 0.0
        %453 = vmatpush1.msra.mxu0 %v329
        %454 = vmatprep.subr.mxu0 0.0
        %455 = vmatpush1.msra.mxu0 %v328
        %456 = vmatprep.subr.mxu0 0.0
        %457 = vmatpush1.msra.mxu0 %v327
        %458 = vmatprep.subr.mxu0 0.0
        %459 = vmatpush1.msra.mxu0 %v326
        %460 = vmatprep.subr.mxu0 0.0
        %461 = vmatpush1.msra.mxu0 %v325
        %462 = vmatprep.subr.mxu0 0.0
        %463 = vmatpush2.msra.mxu0 %v356
        %464 = vmatprep.subr.mxu0 0.0
        %465 = vmatpush2.msra.mxu0 %v355
        %466 = vmatprep.subr.mxu0 0.0
        %467 = vmatpush2.msra.mxu0 %v354
        %468 = vmatprep.subr.mxu0 0.0
        %469 = vmatpush2.msra.mxu0 %v353
        %470 = vmatprep.subr.mxu0 0.0
        %471 = vmatpush2.msra.mxu0 %v352
        %472 = vmatprep.subr.mxu0 0.0
        %473 = vmatpush2.msra.mxu0 %v351
        %474 = vmatprep.subr.mxu0 0.0
        %475 = vmatpush2.msra.mxu0 %v350
        %476 = vmatprep.subr.mxu0 0.0
        %477 = vmatpush2.msra.mxu0 %v349
        %478 = vmatprep.subr.mxu0 0.0
        %479 = vmatpush2.msra.mxu0 %v348
        %480 = vmatprep.subr.mxu0 0.0
        %481 = vmatpush2.msra.mxu0 %v347
        %482 = vmatprep.subr.mxu0 0.0
        %483 = vmatpush2.msra.mxu0 %v346
        %484 = vmatprep.subr.mxu0 0.0
        %485 = vmatpush2.msra.mxu0 %v345
        %486 = vmatprep.subr.mxu0 0.0
        %487 = vmatpush2.msra.mxu0 %v344
        %488 = vmatprep.subr.mxu0 0.0
        %489 = vmatpush2.msra.mxu0 %v343
        %490 = vmatprep.subr.mxu0 0.0
        %491 = vmatpush2.msra.mxu0 %v342
        %492 = vmatprep.subr.mxu0 0.0
        %493 = vmatpush2.msra.mxu0 %v341
        %494 = vmatprep.mubr.f32.mxu0 %v311
        %495 = vmatmul.mubr.f32.gmra.mxu0 %v310
        %v496 = vpop.f32.mrf.mxu0
        %v497 = vadd.f32 %v324, %v496
        %v498 = vpop.f32.mrf.mxu0
        %499 = vmatprep.mubr.f32.mxu0 %v318
        %500 = vmatmul.mubr.f32.gmra.mxu0 %v317
        %v501 = vpop.f32.mrf.mxu0
        %v502 = vadd.f32 %v324, %v501
        %v503 = vpop.f32.mrf.mxu0
        %504 = vdwg.mxu0
        %505 = vmatprep.subr.mxu0 0.0
        %506 = vmatpush1.msra.mxu0 %v372
        %507 = vmatprep.subr.mxu0 0.0
        %508 = vmatpush1.msra.mxu0 %v371
        %509 = vmatprep.subr.mxu0 0.0
        %510 = vmatpush1.msra.mxu0 %v370
        %511 = vmatprep.subr.mxu0 0.0
        %512 = vmatpush1.msra.mxu0 %v369
        %513 = vmatprep.subr.mxu0 0.0
        %514 = vmatpush1.msra.mxu0 %v368
        %515 = vmatprep.subr.mxu0 0.0
        %516 = vmatpush1.msra.mxu0 %v367
        %517 = vmatprep.subr.mxu0 0.0
        %518 = vmatpush1.msra.mxu0 %v366
        %519 = vmatprep.subr.mxu0 0.0
        %520 = vmatpush1.msra.mxu0 %v365
        %521 = vmatprep.subr.mxu0 0.0
        %522 = vmatpush1.msra.mxu0 %v364
        %523 = vmatprep.subr.mxu0 0.0
        %524 = vmatpush1.msra.mxu0 %v363
        %525 = vmatprep.subr.mxu0 0.0
        %526 = vmatpush1.msra.mxu0 %v362
        %527 = vmatprep.subr.mxu0 0.0
        %528 = vmatpush1.msra.mxu0 %v361
        %529 = vmatprep.subr.mxu0 0.0
        %530 = vmatpush1.msra.mxu0 %v360
        %531 = vmatprep.subr.mxu0 0.0
        %532 = vmatpush1.msra.mxu0 %v359
        %533 = vmatprep.subr.mxu0 0.0
        %534 = vmatpush1.msra.mxu0 %v358
        %535 = vmatprep.subr.mxu0 0.0
        %536 = vmatpush1.msra.mxu0 %v357
        %537 = vmatprep.subr.mxu0 0.0
        %538 = vmatpush2.msra.mxu0 %v388
        %539 = vmatprep.subr.mxu0 0.0
        %540 = vmatpush2.msra.mxu0 %v387
        %541 = vmatprep.subr.mxu0 0.0
        %542 = vmatpush2.msra.mxu0 %v386
        %543 = vmatprep.subr.mxu0 0.0
        %544 = vmatpush2.msra.mxu0 %v385
        %545 = vmatprep.subr.mxu0 0.0
        %546 = vmatpush2.msra.mxu0 %v384
        %547 = vmatprep.subr.mxu0 0.0
        %548 = vmatpush2.msra.mxu0 %v383
        %549 = vmatprep.subr.mxu0 0.0
        %550 = vmatpush2.msra.mxu0 %v382
        %551 = vmatprep.subr.mxu0 0.0
        %552 = vmatpush2.msra.mxu0 %v381
        %553 = vmatprep.subr.mxu0 0.0
        %554 = vmatpush2.msra.mxu0 %v380
        %555 = vmatprep.subr.mxu0 0.0
        %556 = vmatpush2.msra.mxu0 %v379
        %557 = vmatprep.subr.mxu0 0.0
        %558 = vmatpush2.msra.mxu0 %v378
        %559 = vmatprep.subr.mxu0 0.0
        %560 = vmatpush2.msra.mxu0 %v377
        %561 = vmatprep.subr.mxu0 0.0
        %562 = vmatpush2.msra.mxu0 %v376
        %563 = vmatprep.subr.mxu0 0.0
        %564 = vmatpush2.msra.mxu0 %v375
        %565 = vmatprep.subr.mxu0 0.0
        %566 = vmatpush2.msra.mxu0 %v374
        %567 = vmatprep.subr.mxu0 0.0
        %568 = vmatpush2.msra.mxu0 %v373
        %569 = vmatprep.mubr.f32.mxu0 %v313
        %570 = vmatmul.mubr.f32.gmra.mxu0 %v312
        %v571 = vpop.f32.mrf.mxu0
        %v572 = vadd.f32 %v497, %v571
        %v573 = vpop.f32.mrf.mxu0
        %574 = vmatprep.mubr.f32.mxu0 %v320
        %575 = vmatmul.mubr.f32.gmra.mxu0 %v319
        %v576 = vpop.f32.mrf.mxu0
        %v577 = vadd.f32 %v502, %v576
        %v578 = vpop.f32.mrf.mxu0
        %579 = vdwg.mxu0
        %580 = vmatprep.subr.mxu0 0.0
        %581 = vmatpush1.msra.mxu0 %v404
        %582 = vmatprep.subr.mxu0 0.0
        %583 = vmatpush1.msra.mxu0 %v403
        %584 = vmatprep.subr.mxu0 0.0
        %585 = vmatpush1.msra.mxu0 %v402
        %586 = vmatprep.subr.mxu0 0.0
        %587 = vmatpush1.msra.mxu0 %v401
        %588 = vmatprep.subr.mxu0 0.0
        %589 = vmatpush1.msra.mxu0 %v400
        %590 = vmatprep.subr.mxu0 0.0
        %591 = vmatpush1.msra.mxu0 %v399
        %592 = vmatprep.subr.mxu0 0.0
        %593 = vmatpush1.msra.mxu0 %v398
        %594 = vmatprep.subr.mxu0 0.0
        %595 = vmatpush1.msra.mxu0 %v397
        %596 = vmatprep.subr.mxu0 0.0
        %597 = vmatpush1.msra.mxu0 %v396
        %598 = vmatprep.subr.mxu0 0.0
        %599 = vmatpush1.msra.mxu0 %v395
        %600 = vmatprep.subr.mxu0 0.0
        %601 = vmatpush1.msra.mxu0 %v394
        %602 = vmatprep.subr.mxu0 0.0
        %603 = vmatpush1.msra.mxu0 %v393
        %604 = vmatprep.subr.mxu0 0.0
        %605 = vmatpush1.msra.mxu0 %v392
        %606 = vmatprep.subr.mxu0 0.0
        %607 = vmatpush1.msra.mxu0 %v391
        %608 = vmatprep.subr.mxu0 0.0
        %609 = vmatpush1.msra.mxu0 %v390
        %610 = vmatprep.subr.mxu0 0.0
        %611 = vmatpush1.msra.mxu0 %v389
        %612 = vmatprep.subr.mxu0 0.0
        %613 = vmatpush2.msra.mxu0 %v420
        %614 = vmatprep.subr.mxu0 0.0
        %615 = vmatpush2.msra.mxu0 %v419
        %616 = vmatprep.subr.mxu0 0.0
        %617 = vmatpush2.msra.mxu0 %v418
        %618 = vmatprep.subr.mxu0 0.0
        %619 = vmatpush2.msra.mxu0 %v417
        %620 = vmatprep.subr.mxu0 0.0
        %621 = vmatpush2.msra.mxu0 %v416
        %622 = vmatprep.subr.mxu0 0.0
        %623 = vmatpush2.msra.mxu0 %v415
        %624 = vmatprep.subr.mxu0 0.0
        %625 = vmatpush2.msra.mxu0 %v414
        %626 = vmatprep.subr.mxu0 0.0
        %627 = vmatpush2.msra.mxu0 %v413
        %628 = vmatprep.subr.mxu0 0.0
        %629 = vmatpush2.msra.mxu0 %v412
        %630 = vmatprep.subr.mxu0 0.0
        %631 = vmatpush2.msra.mxu0 %v411
        %632 = vmatprep.subr.mxu0 0.0
        %633 = vmatpush2.msra.mxu0 %v410
        %634 = vmatprep.subr.mxu0 0.0
        %635 = vmatpush2.msra.mxu0 %v409
        %636 = vmatprep.subr.mxu0 0.0
        %637 = vmatpush2.msra.mxu0 %v408
        %638 = vmatprep.subr.mxu0 0.0
        %639 = vmatpush2.msra.mxu0 %v407
        %640 = vmatprep.subr.mxu0 0.0
        %641 = vmatpush2.msra.mxu0 %v406
        %642 = vmatprep.subr.mxu0 0.0
        %643 = vmatpush2.msra.mxu0 %v405
        %644 = vmatprep.mubr.f32.mxu0 %v315
        %645 = vmatmul.mubr.f32.gmra.mxu0 %v314
        %v646 = vpop.f32.mrf.mxu0
        %v647 = vadd.f32 %v572, %v646
        %v648 = vpop.f32.mrf.mxu0
        %649 = vmatprep.mubr.f32.mxu0 %v322
        %650 = vmatmul.mubr.f32.gmra.mxu0 %v321
        %v651 = vpop.f32.mrf.mxu0
        %v652 = vadd.f32 %v577, %v651
        %v653 = vpop.f32.mrf.mxu0
        %654 = vdwg.mxu0
        %655 = vmatprep.subr.mxu0 0.0
        %656 = vmatpush1.msra.mxu0 0.0
        %657 = vmatprep.subr.mxu0 0.0
        %658 = vmatpush1.msra.mxu0 0.0
        %659 = vmatprep.subr.mxu0 0.0
        %660 = vmatpush1.msra.mxu0 0.0
        %661 = vmatprep.subr.mxu0 0.0
        %662 = vmatpush1.msra.mxu0 0.0
        %663 = vmatprep.subr.mxu0 0.0
        %664 = vmatpush1.msra.mxu0 0.0
        %665 = vmatprep.subr.mxu0 0.0
        %666 = vmatpush1.msra.mxu0 0.0
        %667 = vmatprep.subr.mxu0 0.0
        %668 = vmatpush1.msra.mxu0 0.0
        %669 = vmatprep.subr.mxu0 0.0
        %670 = vmatpush1.msra.mxu0 0.0
        %671 = vmatprep.subr.mxu0 0.0
        %672 = vmatpush1.msra.mxu0 0.0
        %673 = vmatprep.subr.mxu0 0.0
        %674 = vmatpush1.msra.mxu0 0.0
        %675 = vmatprep.subr.mxu0 0.0
        %676 = vmatpush1.msra.mxu0 0.0
        %677 = vmatprep.subr.mxu0 0.0
        %678 = vmatpush1.msra.mxu0 0.0
        %679 = vmatprep.subr.mxu0 0.0
        %680 = vmatpush1.msra.mxu0 0.0
        %681 = vmatprep.subr.mxu0 0.0
        %682 = vmatpush1.msra.mxu0 0.0
        %683 = vmatprep.subr.mxu0 0.0
        %684 = vmatpush1.msra.mxu0 %v422
        %685 = vmatprep.subr.mxu0 0.0
        %686 = vmatpush1.msra.mxu0 %v421
        %687 = vmatprep.subr.mxu0 0.0
        %688 = vmatpush2.msra.mxu0 0.0
        %689 = vmatprep.subr.mxu0 0.0
        %690 = vmatpush2.msra.mxu0 0.0
        %691 = vmatprep.subr.mxu0 0.0
        %692 = vmatpush2.msra.mxu0 0.0
        %693 = vmatprep.subr.mxu0 0.0
        %694 = vmatpush2.msra.mxu0 0.0
        %695 = vmatprep.subr.mxu0 0.0
        %696 = vmatpush2.msra.mxu0 0.0
        %697 = vmatprep.subr.mxu0 0.0
        %698 = vmatpush2.msra.mxu0 0.0
        %699 = vmatprep.subr.mxu0 0.0
        %700 = vmatpush2.msra.mxu0 0.0
        %701 = vmatprep.subr.mxu0 0.0
        %702 = vmatpush2.msra.mxu0 0.0
        %703 = vmatprep.subr.mxu0 0.0
        %704 = vmatpush2.msra.mxu0 0.0
        %705 = vmatprep.subr.mxu0 0.0
        %706 = vmatpush2.msra.mxu0 0.0
        %707 = vmatprep.subr.mxu0 0.0
        %708 = vmatpush2.msra.mxu0 0.0
        %709 = vmatprep.subr.mxu0 0.0
        %710 = vmatpush2.msra.mxu0 0.0
        %711 = vmatprep.subr.mxu0 0.0
        %712 = vmatpush2.msra.mxu0 0.0
        %713 = vmatprep.subr.mxu0 0.0
        %714 = vmatpush2.msra.mxu0 0.0
        %715 = vmatprep.subr.mxu0 0.0
        %716 = vmatpush2.msra.mxu0 0.0
        %717 = vmatprep.subr.mxu0 0.0
        %718 = vmatpush2.msra.mxu0 0.0
        %719 = vmatprep.mubr.f32.mxu0 0.0
        %720 = vmatmul.mubr.f32.gmra.mxu0 %v425
        %v721 = vpop.f32.mrf.mxu0
        %v722 = vadd.f32 %v647, %v721
        %v723 = vpop.f32.mrf.mxu0
        %724 = vmatprep.mubr.f32.mxu0 0.0
        %725 = vmatmul.mubr.f32.gmra.mxu0 %v428
        %v726 = vpop.f32.mrf.mxu0
        %v727 = vadd.f32 %v652, %v726
        %v728 = vpop.f32.mrf.mxu0
        %729 = vdwg.mxu0
        %v730 = vmax.f32 %v722, 0.0
        %v731 = vmax.f32 %v727, 0.0
        %v732 = vld [vmem:[%s7 + $0x1] ss:$0 sm:$0xff]
        %v733 = vld [vmem:[%s2] sm:$0xff]
        %v734 = vld [vmem:[%s2 + $0x8] sm:$0xff]
        %v735 = vld [vmem:[%s2 + $0x10] sm:$0xff]
        %v736 = vld [vmem:[%s2 + $0x18] sm:$0xff]
        %v737 = vld [vmem:[%s2 + $0x20] sm:$0xff]
        %v738 = vld [vmem:[%s2 + $0x28] sm:$0xff]
        %v739 = vld [vmem:[%s2 + $0x30] sm:$0xff]
        %v740 = vld [vmem:[%s2 + $0x38] sm:$0xff]
        %v741 = vld [vmem:[%s2 + $0x40] sm:$0xff]
        %v742 = vld [vmem:[%s2 + $0x48] sm:$0xff]
        %v743 = vld [vmem:[%s2 + $0x50] sm:$0xff]
        %v744 = vld [vmem:[%s2 + $0x58] sm:$0xff]
        %v745 = vld [vmem:[%s2 + $0x60] sm:$0xff]
        %v746 = vld [vmem:[%s2 + $0x68] sm:$0xff]
        %v747 = vld [vmem:[%s2 + $0x70] sm:$0xff]
        %v748 = vld [vmem:[%s2 + $0x78] sm:$0xff]
        %749 = vmatprep.subr.mxu0 0.0
        %750 = vmatpush1.msra.mxu0 %v748
        %751 = vmatprep.subr.mxu0 0.0
        %752 = vmatpush1.msra.mxu0 %v747
        %753 = vmatprep.subr.mxu0 0.0
        %754 = vmatpush1.msra.mxu0 %v746
        %755 = vmatprep.subr.mxu0 0.0
        %756 = vmatpush1.msra.mxu0 %v745
        %757 = vmatprep.subr.mxu0 0.0
        %758 = vmatpush1.msra.mxu0 %v744
        %759 = vmatprep.subr.mxu0 0.0
        %760 = vmatpush1.msra.mxu0 %v743
        %761 = vmatprep.subr.mxu0 0.0
        %762 = vmatpush1.msra.mxu0 %v742
        %763 = vmatprep.subr.mxu0 0.0
        %764 = vmatpush1.msra.mxu0 %v741
        %765 = vmatprep.subr.mxu0 0.0
        %766 = vmatpush1.msra.mxu0 %v740
        %767 = vmatprep.subr.mxu0 0.0
        %768 = vmatpush1.msra.mxu0 %v739
        %769 = vmatprep.subr.mxu0 0.0
        %770 = vmatpush1.msra.mxu0 %v738
        %771 = vmatprep.subr.mxu0 0.0
        %772 = vmatpush1.msra.mxu0 %v737
        %773 = vmatprep.subr.mxu0 0.0
        %774 = vmatpush1.msra.mxu0 %v736
        %775 = vmatprep.subr.mxu0 0.0
        %776 = vmatpush1.msra.mxu0 %v735
        %777 = vmatprep.subr.mxu0 0.0
        %778 = vmatpush1.msra.mxu0 %v734
        %779 = vmatprep.subr.mxu0 0.0
        %780 = vmatpush1.msra.mxu0 %v733
        %781 = vmatprep.subr.mxu0 0.0
        %782 = vmatpush2.msra.mxu0 0.0
        %783 = vmatprep.subr.mxu0 0.0
        %784 = vmatpush2.msra.mxu0 0.0
        %785 = vmatprep.subr.mxu0 0.0
        %786 = vmatpush2.msra.mxu0 0.0
        %787 = vmatprep.subr.mxu0 0.0
        %788 = vmatpush2.msra.mxu0 0.0
        %789 = vmatprep.subr.mxu0 0.0
        %790 = vmatpush2.msra.mxu0 0.0
        %791 = vmatprep.subr.mxu0 0.0
        %792 = vmatpush2.msra.mxu0 0.0
        %793 = vmatprep.subr.mxu0 0.0
        %794 = vmatpush2.msra.mxu0 0.0
        %795 = vmatprep.subr.mxu0 0.0
        %796 = vmatpush2.msra.mxu0 0.0
        %797 = vmatprep.subr.mxu0 0.0
        %798 = vmatpush2.msra.mxu0 0.0
        %799 = vmatprep.subr.mxu0 0.0
        %800 = vmatpush2.msra.mxu0 0.0
        %801 = vmatprep.subr.mxu0 0.0
        %802 = vmatpush2.msra.mxu0 0.0
        %803 = vmatprep.subr.mxu0 0.0
        %804 = vmatpush2.msra.mxu0 0.0
        %805 = vmatprep.subr.mxu0 0.0
        %806 = vmatpush2.msra.mxu0 0.0
        %807 = vmatprep.subr.mxu0 0.0
        %808 = vmatpush2.msra.mxu0 0.0
        %809 = vmatprep.subr.mxu0 0.0
        %810 = vmatpush2.msra.mxu0 0.0
        %811 = vmatprep.subr.mxu0 0.0
        %812 = vmatpush2.msra.mxu0 0.0
        %813 = vmatprep.mubr.f32.mxu0 0.0
        %814 = vmatmul.mubr.f32.gmra.mxu0 %v730
        %v815 = vpop.f32.mrf.mxu0
        %v816 = vadd.f32 %v732, %v815
        %v817 = vpop.f32.mrf.mxu0
        %818 = vmatprep.mubr.f32.mxu0 0.0
        %819 = vmatmul.mubr.f32.gmra.mxu0 %v731
        %v820 = vpop.f32.mrf.mxu0
        %v821 = vadd.f32 %v732, %v820
        %v822 = vpop.f32.mrf.mxu0
        %823 = vdwg.mxu0
        %v824 = vmax.f32 %v816, 0.0
        %v825 = vmax.f32 %v821, 0.0
        %v826 = vld [vmem:[%s7 + $0x2] ss:$0 sm:$0xff]
        %v827 = vld [vmem:[%s3] sm:$0xff]
        %v828 = vld [vmem:[%s3 + $0x8] sm:$0xff]
        %v829 = vld [vmem:[%s3 + $0x10] sm:$0xff]
        %v830 = vld [vmem:[%s3 + $0x18] sm:$0xff]
        %v831 = vld [vmem:[%s3 + $0x20] sm:$0xff]
        %v832 = vld [vmem:[%s3 + $0x28] sm:$0xff]
        %v833 = vld [vmem:[%s3 + $0x30] sm:$0xff]
        %v834 = vld [vmem:[%s3 + $0x38] sm:$0xff]
        %vm835 = vcmask 523264
        %v837 = vsel %vm835, %v824, 0
        %v840 = vsel %vm835, %v825, 0
        %842 = vmatprep.subr.mxu0 0.0
        %843 = vmatpush1.msra.mxu0 0.0
        %844 = vmatprep.subr.mxu0 0.0
        %845 = vmatpush1.msra.mxu0 0.0
        %846 = vmatprep.subr.mxu0 0.0
        %847 = vmatpush1.msra.mxu0 0.0
        %848 = vmatprep.subr.mxu0 0.0
        %849 = vmatpush1.msra.mxu0 0.0
        %850 = vmatprep.subr.mxu0 0.0
        %851 = vmatpush1.msra.mxu0 0.0
        %852 = vmatprep.subr.mxu0 0.0
        %853 = vmatpush1.msra.mxu0 0.0
        %854 = vmatprep.subr.mxu0 0.0
        %855 = vmatpush1.msra.mxu0 0.0
        %856 = vmatprep.subr.mxu0 0.0
        %857 = vmatpush1.msra.mxu0 0.0
        %858 = vmatprep.subr.mxu0 0.0
        %859 = vmatpush1.msra.mxu0 %v834
        %860 = vmatprep.subr.mxu0 0.0
        %861 = vmatpush1.msra.mxu0 %v833
        %862 = vmatprep.subr.mxu0 0.0
        %863 = vmatpush1.msra.mxu0 %v832
        %864 = vmatprep.subr.mxu0 0.0
        %865 = vmatpush1.msra.mxu0 %v831
        %866 = vmatprep.subr.mxu0 0.0
        %867 = vmatpush1.msra.mxu0 %v830
        %868 = vmatprep.subr.mxu0 0.0
        %869 = vmatpush1.msra.mxu0 %v829
        %870 = vmatprep.subr.mxu0 0.0
        %871 = vmatpush1.msra.mxu0 %v828
        %872 = vmatprep.subr.mxu0 0.0
        %873 = vmatpush1.msra.mxu0 %v827
        %874 = vmatprep.subr.mxu0 0.0
        %875 = vmatpush2.msra.mxu0 0.0
        %876 = vmatprep.subr.mxu0 0.0
        %877 = vmatpush2.msra.mxu0 0.0
        %878 = vmatprep.subr.mxu0 0.0
        %879 = vmatpush2.msra.mxu0 0.0
        %880 = vmatprep.subr.mxu0 0.0
        %881 = vmatpush2.msra.mxu0 0.0
        %882 = vmatprep.subr.mxu0 0.0
        %883 = vmatpush2.msra.mxu0 0.0
        %884 = vmatprep.subr.mxu0 0.0
        %885 = vmatpush2.msra.mxu0 0.0
        %886 = vmatprep.subr.mxu0 0.0
        %887 = vmatpush2.msra.mxu0 0.0
        %888 = vmatprep.subr.mxu0 0.0
        %889 = vmatpush2.msra.mxu0 0.0
        %890 = vmatprep.subr.mxu0 0.0
        %891 = vmatpush2.msra.mxu0 0.0
        %892 = vmatprep.subr.mxu0 0.0
        %893 = vmatpush2.msra.mxu0 0.0
        %894 = vmatprep.subr.mxu0 0.0
        %895 = vmatpush2.msra.mxu0 0.0
        %896 = vmatprep.subr.mxu0 0.0
        %897 = vmatpush2.msra.mxu0 0.0
        %898 = vmatprep.subr.mxu0 0.0
        %899 = vmatpush2.msra.mxu0 0.0
        %900 = vmatprep.subr.mxu0 0.0
        %901 = vmatpush2.msra.mxu0 0.0
        %902 = vmatprep.subr.mxu0 0.0
        %903 = vmatpush2.msra.mxu0 0.0
        %904 = vmatprep.subr.mxu0 0.0
        %905 = vmatpush2.msra.mxu0 0.0
        %906 = vmatprep.mubr.f32.mxu0 0.0
        %907 = vmatmul.mubr.f32.gmra.mxu0 %v837
        %v908 = vpop.f32.mrf.mxu0
        %v909 = vadd.f32 %v826, %v908
        %v910 = vpop.f32.mrf.mxu0
        %911 = vmatprep.mubr.f32.mxu0 0.0
        %912 = vmatmul.mubr.f32.gmra.mxu0 %v840
        %v913 = vpop.f32.mrf.mxu0
        %v914 = vadd.f32 %v826, %v913
        %v915 = vpop.f32.mrf.mxu0
        %916 = vdwg.mxu0
        %v917 = vmax.f32 %v909, 0.0
        %v918 = vmax.f32 %v914, 0.0
        %v919 = vld [vmem:[%s7 + $0x3] ss:$0 sm:$0xff]
        %v920 = vld [vmem:[%s4] sm:$0xff]
        %v921 = vld [vmem:[%s4 + $0x8] sm:$0xff]
        %v922 = vld [vmem:[%s4 + $0x10] sm:$0xff]
        %v923 = vld [vmem:[%s4 + $0x18] sm:$0xff]
        %vm924 = vcmask 261120
        %v926 = vsel %vm924, %v917, 0
        %v929 = vsel %vm924, %v918, 0
        %931 = vmatprep.subr.mxu0 0.0
        %932 = vmatpush1.msra.mxu0 0.0
        %933 = vmatprep.subr.mxu0 0.0
        %934 = vmatpush1.msra.mxu0 0.0
        %935 = vmatprep.subr.mxu0 0.0
        %936 = vmatpush1.msra.mxu0 0.0
        %937 = vmatprep.subr.mxu0 0.0
        %938 = vmatpush1.msra.mxu0 0.0
        %939 = vmatprep.subr.mxu0 0.0
        %940 = vmatpush1.msra.mxu0 0.0
        %941 = vmatprep.subr.mxu0 0.0
        %942 = vmatpush1.msra.mxu0 0.0
        %943 = vmatprep.subr.mxu0 0.0
        %944 = vmatpush1.msra.mxu0 0.0
        %945 = vmatprep.subr.mxu0 0.0
        %946 = vmatpush1.msra.mxu0 0.0
        %947 = vmatprep.subr.mxu0 0.0
        %948 = vmatpush1.msra.mxu0 0.0
        %949 = vmatprep.subr.mxu0 0.0
        %950 = vmatpush1.msra.mxu0 0.0
        %951 = vmatprep.subr.mxu0 0.0
        %952 = vmatpush1.msra.mxu0 0.0
        %953 = vmatprep.subr.mxu0 0.0
        %954 = vmatpush1.msra.mxu0 0.0
        %955 = vmatprep.subr.mxu0 0.0
        %956 = vmatpush1.msra.mxu0 %v923
        %957 = vmatprep.subr.mxu0 0.0
        %958 = vmatpush1.msra.mxu0 %v922
        %959 = vmatprep.subr.mxu0 0.0
        %960 = vmatpush1.msra.mxu0 %v921
        %961 = vmatprep.subr.mxu0 0.0
        %962 = vmatpush1.msra.mxu0 %v920
        %963 = vmatprep.subr.mxu0 0.0
        %964 = vmatpush2.msra.mxu0 0.0
        %965 = vmatprep.subr.mxu0 0.0
        %966 = vmatpush2.msra.mxu0 0.0
        %967 = vmatprep.subr.mxu0 0.0
        %968 = vmatpush2.msra.mxu0 0.0
        %969 = vmatprep.subr.mxu0 0.0
        %970 = vmatpush2.msra.mxu0 0.0
        %971 = vmatprep.subr.mxu0 0.0
        %972 = vmatpush2.msra.mxu0 0.0
        %973 = vmatprep.subr.mxu0 0.0
        %974 = vmatpush2.msra.mxu0 0.0
        %975 = vmatprep.subr.mxu0 0.0
        %976 = vmatpush2.msra.mxu0 0.0
        %977 = vmatprep.subr.mxu0 0.0
        %978 = vmatpush2.msra.mxu0 0.0
        %979 = vmatprep.subr.mxu0 0.0
        %980 = vmatpush2.msra.mxu0 0.0
        %981 = vmatprep.subr.mxu0 0.0
        %982 = vmatpush2.msra.mxu0 0.0
        %983 = vmatprep.subr.mxu0 0.0
        %984 = vmatpush2.msra.mxu0 0.0
        %985 = vmatprep.subr.mxu0 0.0
        %986 = vmatpush2.msra.mxu0 0.0
        %987 = vmatprep.subr.mxu0 0.0
        %988 = vmatpush2.msra.mxu0 0.0
        %989 = vmatprep.subr.mxu0 0.0
        %990 = vmatpush2.msra.mxu0 0.0
        %991 = vmatprep.subr.mxu0 0.0
        %992 = vmatpush2.msra.mxu0 0.0
        %993 = vmatprep.subr.mxu0 0.0
        %994 = vmatpush2.msra.mxu0 0.0
        %995 = vmatprep.mubr.f32.mxu0 0.0
        %996 = vmatmul.mubr.f32.gmra.mxu0 %v926
        %v997 = vpop.f32.mrf.mxu0
        %v998 = vadd.f32 %v919, %v997
        %v999 = vpop.f32.mrf.mxu0
        %1000 = vmatprep.mubr.f32.mxu0 0.0
        %1001 = vmatmul.mubr.f32.gmra.mxu0 %v929
        %v1002 = vpop.f32.mrf.mxu0
        %v1003 = vadd.f32 %v919, %v1002
        %v1004 = vpop.f32.mrf.mxu0
        %1005 = vdwg.mxu0
        %v1006 = vmax.f32 %v998, 0.0
        %v1007 = vmax.f32 %v1003, 0.0
        %v1008 = vld [vmem:[%s7 + $0x4] ss:$0 sm:$0xff]
        %v1009 = vld [vmem:[%s5] sm:$0xff]
        %v1010 = vld [vmem:[%s5 + $0x8] sm:$0xff]
        %v1011 = vld [vmem:[%s5 + $0x10] sm:$0xff]
        %v1012 = vld [vmem:[%s5 + $0x18] sm:$0xff]
        %v1013 = vld [vmem:[%s5 + $0x20] sm:$0xff]
        %v1014 = vld [vmem:[%s5 + $0x28] sm:$0xff]
        %v1015 = vld [vmem:[%s5 + $0x30] sm:$0xff]
        %v1016 = vld [vmem:[%s5 + $0x38] sm:$0xff]
        %v1018 = vsel %vm835, %v1006, 0
        %v1021 = vsel %vm835, %v1007, 0
        %1023 = vmatprep.subr.mxu0 0.0
        %1024 = vmatpush1.msra.mxu0 0.0
        %1025 = vmatprep.subr.mxu0 0.0
        %1026 = vmatpush1.msra.mxu0 0.0
        %1027 = vmatprep.subr.mxu0 0.0
        %1028 = vmatpush1.msra.mxu0 0.0
        %1029 = vmatprep.subr.mxu0 0.0
        %1030 = vmatpush1.msra.mxu0 0.0
        %1031 = vmatprep.subr.mxu0 0.0
        %1032 = vmatpush1.msra.mxu0 0.0
        %1033 = vmatprep.subr.mxu0 0.0
        %1034 = vmatpush1.msra.mxu0 0.0
        %1035 = vmatprep.subr.mxu0 0.0
        %1036 = vmatpush1.msra.mxu0 0.0
        %1037 = vmatprep.subr.mxu0 0.0
        %1038 = vmatpush1.msra.mxu0 0.0
        %1039 = vmatprep.subr.mxu0 0.0
        %1040 = vmatpush1.msra.mxu0 %v1016
        %1041 = vmatprep.subr.mxu0 0.0
        %1042 = vmatpush1.msra.mxu0 %v1015
        %1043 = vmatprep.subr.mxu0 0.0
        %1044 = vmatpush1.msra.mxu0 %v1014
        %1045 = vmatprep.subr.mxu0 0.0
        %1046 = vmatpush1.msra.mxu0 %v1013
        %1047 = vmatprep.subr.mxu0 0.0
        %1048 = vmatpush1.msra.mxu0 %v1012
        %1049 = vmatprep.subr.mxu0 0.0
        %1050 = vmatpush1.msra.mxu0 %v1011
        %1051 = vmatprep.subr.mxu0 0.0
        %1052 = vmatpush1.msra.mxu0 %v1010
        %1053 = vmatprep.subr.mxu0 0.0
        %1054 = vmatpush1.msra.mxu0 %v1009
        %1055 = vmatprep.subr.mxu0 0.0
        %1056 = vmatpush2.msra.mxu0 0.0
        %1057 = vmatprep.subr.mxu0 0.0
        %1058 = vmatpush2.msra.mxu0 0.0
        %1059 = vmatprep.subr.mxu0 0.0
        %1060 = vmatpush2.msra.mxu0 0.0
        %1061 = vmatprep.subr.mxu0 0.0
        %1062 = vmatpush2.msra.mxu0 0.0
        %1063 = vmatprep.subr.mxu0 0.0
        %1064 = vmatpush2.msra.mxu0 0.0
        %1065 = vmatprep.subr.mxu0 0.0
        %1066 = vmatpush2.msra.mxu0 0.0
        %1067 = vmatprep.subr.mxu0 0.0
        %1068 = vmatpush2.msra.mxu0 0.0
        %1069 = vmatprep.subr.mxu0 0.0
        %1070 = vmatpush2.msra.mxu0 0.0
        %1071 = vmatprep.subr.mxu0 0.0
        %1072 = vmatpush2.msra.mxu0 0.0
        %1073 = vmatprep.subr.mxu0 0.0
        %1074 = vmatpush2.msra.mxu0 0.0
        %1075 = vmatprep.subr.mxu0 0.0
        %1076 = vmatpush2.msra.mxu0 0.0
        %1077 = vmatprep.subr.mxu0 0.0
        %1078 = vmatpush2.msra.mxu0 0.0
        %1079 = vmatprep.subr.mxu0 0.0
        %1080 = vmatpush2.msra.mxu0 0.0
        %1081 = vmatprep.subr.mxu0 0.0
        %1082 = vmatpush2.msra.mxu0 0.0
        %1083 = vmatprep.subr.mxu0 0.0
        %1084 = vmatpush2.msra.mxu0 0.0
        %1085 = vmatprep.subr.mxu0 0.0
        %1086 = vmatpush2.msra.mxu0 0.0
        %1087 = vmatprep.mubr.f32.mxu0 0.0
        %1088 = vmatmul.mubr.f32.gmra.mxu0 %v1018
        %v1089 = vpop.f32.mrf.mxu0
        %v1090 = vadd.f32 %v1008, %v1089
        %v1091 = vpop.f32.mrf.mxu0
        %1092 = vmatprep.mubr.f32.mxu0 0.0
        %1093 = vmatmul.mubr.f32.gmra.mxu0 %v1021
        %v1094 = vpop.f32.mrf.mxu0
        %v1095 = vadd.f32 %v1008, %v1094
        %v1096 = vpop.f32.mrf.mxu0
        %1097 = vdwg.mxu0
        %v1098 = vmax.f32 %v1090, 0.0
        %v1099 = vmax.f32 %v1095, 0.0
        %s1100 = scalar_lea.vmem %s7, 5
        %v1101 = vld [vmem:[%s1100] ss:$8 sm:$0xf]
        %v1102 = vld [vmem:[%s1100] ss:$8 sm:$0x70]
        %v1103 = vor.u32 %v1101, %v1102
        %v1104 = vld [vmem:[%s6] sm:$0xff]
        %v1105 = vld [vmem:[%s6 + $0x8] sm:$0xff]
        %v1106 = vld [vmem:[%s6 + $0x10] sm:$0xff]
        %v1107 = vld [vmem:[%s6 + $0x18] sm:$0xff]
        %v1108 = vld [vmem:[%s6 + $0x20] sm:$0xff]
        %v1109 = vld [vmem:[%s6 + $0x28] sm:$0xff]
        %v1110 = vld [vmem:[%s6 + $0x30] sm:$0xff]
        %v1111 = vld [vmem:[%s6 + $0x38] sm:$0xff]
        %v1112 = vld [vmem:[%s6 + $0x40] sm:$0xff]
        %v1113 = vld [vmem:[%s6 + $0x48] sm:$0xff]
        %v1114 = vld [vmem:[%s6 + $0x50] sm:$0xff]
        %v1115 = vld [vmem:[%s6 + $0x58] sm:$0xff]
        %v1116 = vld [vmem:[%s6 + $0x60] sm:$0xff]
        %v1117 = vld [vmem:[%s6 + $0x68] sm:$0xff]
        %v1118 = vld [vmem:[%s6 + $0x70] sm:$0xff]
        %v1119 = vld [vmem:[%s6 + $0x78] sm:$0xff]
        %v1120 = vld [vmem:[%s6 + $0x80] sm:$0xff]
        %v1121 = vld [vmem:[%s6 + $0x88] sm:$0xff]
        %v1122 = vld [vmem:[%s6 + $0x90] sm:$0xff]
        %v1123 = vld [vmem:[%s6 + $0x98] sm:$0xff]
        %v1124 = vld [vmem:[%s6 + $0xa0] sm:$0xff]
        %v1125 = vld [vmem:[%s6 + $0xa8] sm:$0xff]
        %v1126 = vld [vmem:[%s6 + $0xb0] sm:$0xff]
        %v1127 = vld [vmem:[%s6 + $0xb8] sm:$0xff]
        %v1128 = vld [vmem:[%s6 + $0xc0] sm:$0xff]
        %v1129 = vld [vmem:[%s6 + $0xc8] sm:$0xff]
        %v1130 = vld [vmem:[%s6 + $0xd0] sm:$0xff]
        %v1131 = vld [vmem:[%s6 + $0xd8] sm:$0xff]
        %v1132 = vld [vmem:[%s6 + $0xe0] sm:$0xff]
        %v1133 = vld [vmem:[%s6 + $0xe8] sm:$0xff]
        %v1134 = vld [vmem:[%s6 + $0xf0] sm:$0xff]
        %v1135 = vld [vmem:[%s6 + $0xf8] sm:$0xff]
        %v1136 = vld [vmem:[%s6 + $0x100] sm:$0xff]
        %v1137 = vld [vmem:[%s6 + $0x108] sm:$0xff]
        %v1138 = vld [vmem:[%s6 + $0x110] sm:$0xff]
        %v1139 = vld [vmem:[%s6 + $0x118] sm:$0xff]
        %v1140 = vld [vmem:[%s6 + $0x120] sm:$0xff]
        %v1141 = vld [vmem:[%s6 + $0x128] sm:$0xff]
        %v1142 = vld [vmem:[%s6 + $0x130] sm:$0xff]
        %v1143 = vld [vmem:[%s6 + $0x138] sm:$0xff]
        %v1144 = vld [vmem:[%s6 + $0x140] sm:$0xff]
        %v1145 = vld [vmem:[%s6 + $0x148] sm:$0xff]
        %v1146 = vld [vmem:[%s6 + $0x150] sm:$0xff]
        %v1147 = vld [vmem:[%s6 + $0x158] sm:$0xff]
        %v1148 = vld [vmem:[%s6 + $0x160] sm:$0xff]
        %v1149 = vld [vmem:[%s6 + $0x168] sm:$0xff]
        %v1150 = vld [vmem:[%s6 + $0x170] sm:$0xff]
        %v1151 = vld [vmem:[%s6 + $0x178] sm:$0xff]
        %v1152 = vld [vmem:[%s6 + $0x180] sm:$0xff]
        %v1153 = vld [vmem:[%s6 + $0x188] sm:$0xff]
        %v1154 = vld [vmem:[%s6 + $0x190] sm:$0xff]
        %v1155 = vld [vmem:[%s6 + $0x198] sm:$0xff]
        %v1156 = vld [vmem:[%s6 + $0x1a0] sm:$0xff]
        %v1157 = vld [vmem:[%s6 + $0x1a8] sm:$0xff]
        %v1158 = vld [vmem:[%s6 + $0x1b0] sm:$0xff]
        %v1159 = vld [vmem:[%s6 + $0x1b8] sm:$0xff]
        %v1160 = vld [vmem:[%s6 + $0x1c0] sm:$0xff]
        %v1161 = vld [vmem:[%s6 + $0x1c8] sm:$0xff]
        %v1162 = vld [vmem:[%s6 + $0x1d0] sm:$0xff]
        %v1163 = vld [vmem:[%s6 + $0x1d8] sm:$0xff]
        %v1164 = vld [vmem:[%s6 + $0x1e0] sm:$0xff]
        %v1165 = vld [vmem:[%s6 + $0x1e8] sm:$0xff]
        %v1166 = vld [vmem:[%s6 + $0x1f0] sm:$0xff]
        %v1167 = vld [vmem:[%s6 + $0x1f8] sm:$0xff]
        %v1168 = vld [vmem:[%s6 + $0x200] sm:$0xff]
        %v1169 = vld [vmem:[%s6 + $0x208] sm:$0xff]
        %v1170 = vld [vmem:[%s6 + $0x210] sm:$0xff]
        %v1171 = vld [vmem:[%s6 + $0x218] sm:$0xff]
        %v1172 = vld [vmem:[%s6 + $0x220] sm:$0xff]
        %v1173 = vld [vmem:[%s6 + $0x228] sm:$0xff]
        %v1174 = vld [vmem:[%s6 + $0x230] sm:$0xff]
        %v1175 = vld [vmem:[%s6 + $0x238] sm:$0xff]
        %v1176 = vld [vmem:[%s6 + $0x240] sm:$0xff]
        %v1177 = vld [vmem:[%s6 + $0x248] sm:$0xff]
        %v1178 = vld [vmem:[%s6 + $0x250] sm:$0xff]
        %v1179 = vld [vmem:[%s6 + $0x258] sm:$0xff]
        %v1180 = vld [vmem:[%s6 + $0x260] sm:$0xff]
        %v1181 = vld [vmem:[%s6 + $0x268] sm:$0xff]
        %v1182 = vld [vmem:[%s6 + $0x270] sm:$0xff]
        %v1183 = vld [vmem:[%s6 + $0x278] sm:$0xff]
        %v1184 = vld [vmem:[%s6 + $0x280] sm:$0xff]
        %v1185 = vld [vmem:[%s6 + $0x288] sm:$0xff]
        %v1186 = vld [vmem:[%s6 + $0x290] sm:$0xff]
        %v1187 = vld [vmem:[%s6 + $0x298] sm:$0xff]
        %v1188 = vld [vmem:[%s6 + $0x2a0] sm:$0xff]
        %v1189 = vld [vmem:[%s6 + $0x2a8] sm:$0xff]
        %v1190 = vld [vmem:[%s6 + $0x2b0] sm:$0xff]
        %v1191 = vld [vmem:[%s6 + $0x2b8] sm:$0xff]
        %v1192 = vld [vmem:[%s6 + $0x2c0] sm:$0xff]
        %v1193 = vld [vmem:[%s6 + $0x2c8] sm:$0xff]
        %v1194 = vld [vmem:[%s6 + $0x2d0] sm:$0xff]
        %v1195 = vld [vmem:[%s6 + $0x2d8] sm:$0xff]
        %v1196 = vld [vmem:[%s6 + $0x2e0] sm:$0xff]
        %v1197 = vld [vmem:[%s6 + $0x2e8] sm:$0xff]
        %v1198 = vld [vmem:[%s6 + $0x2f0] sm:$0xff]
        %v1199 = vld [vmem:[%s6 + $0x2f8] sm:$0xff]
        %v1200 = vld [vmem:[%s6 + $0x300] sm:$0xff]
        %v1201 = vld [vmem:[%s6 + $0x308] sm:$0xff]
        %v1202 = vld [vmem:[%s6 + $0x310] sm:$0xff]
        %v1203 = vld [vmem:[%s6 + $0x318] sm:$0xff]
        %v1204 = vld [vmem:[%s6 + $0x320] sm:$0xff]
        %v1205 = vld [vmem:[%s6 + $0x328] sm:$0xff]
        %v1206 = vld [vmem:[%s6 + $0x330] sm:$0xff]
        %v1207 = vld [vmem:[%s6 + $0x338] sm:$0xff]
        %v1208 = vld [vmem:[%s6 + $0x340] sm:$0xff]
        %v1209 = vld [vmem:[%s6 + $0x348] sm:$0xff]
        %v1210 = vld [vmem:[%s6 + $0x350] sm:$0xff]
        %v1211 = vld [vmem:[%s6 + $0x358] sm:$0xff]
        %v1212 = vld [vmem:[%s6 + $0x360] sm:$0xff]
        %v1213 = vld [vmem:[%s6 + $0x368] sm:$0xff]
        %v1214 = vld [vmem:[%s6 + $0x370] sm:$0xff]
        %v1215 = vld [vmem:[%s6 + $0x378] sm:$0xff]
        %v1217 = vlaneseq
        %v1218 = vshrl.u32 %v1217, 7
        %v1219 = vsub.s32 0, %v1218
        %v1220 = vrot.slane %v1103, %v1219
        %v1221 = vlaneseq
        %v1222 = vshrl.u32 %v1221, 7
        %v1223 = vsub.s32 1, %v1222
        %v1224 = vrot.slane %v1103, %v1223
        %v1225 = vlaneseq
        %v1226 = vshrl.u32 %v1225, 7
        %v1227 = vsub.s32 2, %v1226
        %v1228 = vrot.slane %v1103, %v1227
        %v1229 = vlaneseq
        %v1230 = vshrl.u32 %v1229, 7
        %v1231 = vsub.s32 3, %v1230
        %v1232 = vrot.slane %v1103, %v1231
        %v1233 = vlaneseq
        %v1234 = vshrl.u32 %v1233, 7
        %v1235 = vsub.s32 4, %v1234
        %v1236 = vrot.slane %v1103, %v1235
        %v1237 = vlaneseq
        %v1238 = vshrl.u32 %v1237, 7
        %v1239 = vsub.s32 5, %v1238
        %v1240 = vrot.slane %v1103, %v1239
        %v1241 = vlaneseq
        %v1242 = vshrl.u32 %v1241, 7
        %v1243 = vsub.s32 6, %v1242
        %v1244 = vrot.slane %v1103, %v1243
        %1252 = vmatprep.subr.mxu0 %v1210
        %1253 = vmatpush1.msra.mxu0 %v1209
        %1254 = vmatprep.subr.mxu0 %v1203
        %1255 = vmatpush1.msra.mxu0 %v1202
        %1256 = vmatprep.subr.mxu0 %v1196
        %1257 = vmatpush1.msra.mxu0 %v1195
        %1258 = vmatprep.subr.mxu0 %v1189
        %1259 = vmatpush1.msra.mxu0 %v1188
        %1260 = vmatprep.subr.mxu0 %v1182
        %1261 = vmatpush1.msra.mxu0 %v1181
        %1262 = vmatprep.subr.mxu0 %v1175
        %1263 = vmatpush1.msra.mxu0 %v1174
        %1264 = vmatprep.subr.mxu0 %v1168
        %1265 = vmatpush1.msra.mxu0 %v1167
        %1266 = vmatprep.subr.mxu0 %v1161
        %1267 = vmatpush1.msra.mxu0 %v1160
        %1268 = vmatprep.subr.mxu0 %v1154
        %1269 = vmatpush1.msra.mxu0 %v1153
        %1270 = vmatprep.subr.mxu0 %v1147
        %1271 = vmatpush1.msra.mxu0 %v1146
        %1272 = vmatprep.subr.mxu0 %v1140
        %1273 = vmatpush1.msra.mxu0 %v1139
        %1274 = vmatprep.subr.mxu0 %v1133
        %1275 = vmatpush1.msra.mxu0 %v1132
        %1276 = vmatprep.subr.mxu0 %v1126
        %1277 = vmatpush1.msra.mxu0 %v1125
        %1278 = vmatprep.subr.mxu0 %v1119
        %1279 = vmatpush1.msra.mxu0 %v1118
        %1280 = vmatprep.subr.mxu0 %v1112
        %1281 = vmatpush1.msra.mxu0 %v1111
        %1282 = vmatprep.subr.mxu0 %v1105
        %1283 = vmatpush1.msra.mxu0 %v1104
        %1284 = vmatprep.subr.mxu0 0.0
        %1285 = vmatpush2.msra.mxu0 0.0
        %1286 = vmatprep.subr.mxu0 0.0
        %1287 = vmatpush2.msra.mxu0 0.0
        %1288 = vmatprep.subr.mxu0 0.0
        %1289 = vmatpush2.msra.mxu0 0.0
        %1290 = vmatprep.subr.mxu0 0.0
        %1291 = vmatpush2.msra.mxu0 0.0
        %1292 = vmatprep.subr.mxu0 0.0
        %1293 = vmatpush2.msra.mxu0 0.0
        %1294 = vmatprep.subr.mxu0 0.0
        %1295 = vmatpush2.msra.mxu0 0.0
        %1296 = vmatprep.subr.mxu0 0.0
        %1297 = vmatpush2.msra.mxu0 0.0
        %1298 = vmatprep.subr.mxu0 0.0
        %1299 = vmatpush2.msra.mxu0 0.0
        %1300 = vmatprep.subr.mxu0 0.0
        %1301 = vmatpush2.msra.mxu0 0.0
        %1302 = vmatprep.subr.mxu0 0.0
        %1303 = vmatpush2.msra.mxu0 0.0
        %1304 = vmatprep.subr.mxu0 0.0
        %1305 = vmatpush2.msra.mxu0 0.0
        %1306 = vmatprep.subr.mxu0 0.0
        %1307 = vmatpush2.msra.mxu0 0.0
        %1308 = vmatprep.subr.mxu0 0.0
        %1309 = vmatpush2.msra.mxu0 0.0
        %1310 = vmatprep.subr.mxu0 0.0
        %1311 = vmatpush2.msra.mxu0 0.0
        %1312 = vmatprep.subr.mxu0 0.0
        %1313 = vmatpush2.msra.mxu0 0.0
        %1314 = vmatprep.subr.mxu0 0.0
        %1315 = vmatpush2.msra.mxu0 0.0
        %1316 = vmatprep.mubr.f32.mxu0 0.0
        %1317 = vmatmul.mubr.f32.gmra.mxu0 %v1098
        %v1318 = vpop.f32.mrf.mxu0
        %v1319 = vadd.f32 %v1220, %v1318
        %v1320 = vpop.f32.mrf.mxu0
        %v1321 = vadd.f32 %v1224, %v1320
        %1322 = vmatprep.mubr.f32.mxu0 0.0
        %1323 = vmatmul.mubr.f32.gmra.mxu0 %v1099
        %v1324 = vpop.f32.mrf.mxu0
        %v1325 = vadd.f32 %v1220, %v1324
        %v1326 = vpop.f32.mrf.mxu0
        %v1327 = vadd.f32 %v1224, %v1326
        %1328 = vdwg.mxu0
        %1329 = vmatprep.subr.mxu0 %v1212
        %1330 = vmatpush1.msra.mxu0 %v1211
        %1331 = vmatprep.subr.mxu0 %v1205
        %1332 = vmatpush1.msra.mxu0 %v1204
        %1333 = vmatprep.subr.mxu0 %v1198
        %1334 = vmatpush1.msra.mxu0 %v1197
        %1335 = vmatprep.subr.mxu0 %v1191
        %1336 = vmatpush1.msra.mxu0 %v1190
        %1337 = vmatprep.subr.mxu0 %v1184
        %1338 = vmatpush1.msra.mxu0 %v1183
        %1339 = vmatprep.subr.mxu0 %v1177
        %1340 = vmatpush1.msra.mxu0 %v1176
        %1341 = vmatprep.subr.mxu0 %v1170
        %1342 = vmatpush1.msra.mxu0 %v1169
        %1343 = vmatprep.subr.mxu0 %v1163
        %1344 = vmatpush1.msra.mxu0 %v1162
        %1345 = vmatprep.subr.mxu0 %v1156
        %1346 = vmatpush1.msra.mxu0 %v1155
        %1347 = vmatprep.subr.mxu0 %v1149
        %1348 = vmatpush1.msra.mxu0 %v1148
        %1349 = vmatprep.subr.mxu0 %v1142
        %1350 = vmatpush1.msra.mxu0 %v1141
        %1351 = vmatprep.subr.mxu0 %v1135
        %1352 = vmatpush1.msra.mxu0 %v1134
        %1353 = vmatprep.subr.mxu0 %v1128
        %1354 = vmatpush1.msra.mxu0 %v1127
        %1355 = vmatprep.subr.mxu0 %v1121
        %1356 = vmatpush1.msra.mxu0 %v1120
        %1357 = vmatprep.subr.mxu0 %v1114
        %1358 = vmatpush1.msra.mxu0 %v1113
        %1359 = vmatprep.subr.mxu0 %v1107
        %1360 = vmatpush1.msra.mxu0 %v1106
        %1361 = vmatprep.subr.mxu0 0.0
        %1362 = vmatpush2.msra.mxu0 0.0
        %1363 = vmatprep.subr.mxu0 0.0
        %1364 = vmatpush2.msra.mxu0 0.0
        %1365 = vmatprep.subr.mxu0 0.0
        %1366 = vmatpush2.msra.mxu0 0.0
        %1367 = vmatprep.subr.mxu0 0.0
        %1368 = vmatpush2.msra.mxu0 0.0
        %1369 = vmatprep.subr.mxu0 0.0
        %1370 = vmatpush2.msra.mxu0 0.0
        %1371 = vmatprep.subr.mxu0 0.0
        %1372 = vmatpush2.msra.mxu0 0.0
        %1373 = vmatprep.subr.mxu0 0.0
        %1374 = vmatpush2.msra.mxu0 0.0
        %1375 = vmatprep.subr.mxu0 0.0
        %1376 = vmatpush2.msra.mxu0 0.0
        %1377 = vmatprep.subr.mxu0 0.0
        %1378 = vmatpush2.msra.mxu0 0.0
        %1379 = vmatprep.subr.mxu0 0.0
        %1380 = vmatpush2.msra.mxu0 0.0
        %1381 = vmatprep.subr.mxu0 0.0
        %1382 = vmatpush2.msra.mxu0 0.0
        %1383 = vmatprep.subr.mxu0 0.0
        %1384 = vmatpush2.msra.mxu0 0.0
        %1385 = vmatprep.subr.mxu0 0.0
        %1386 = vmatpush2.msra.mxu0 0.0
        %1387 = vmatprep.subr.mxu0 0.0
        %1388 = vmatpush2.msra.mxu0 0.0
        %1389 = vmatprep.subr.mxu0 0.0
        %1390 = vmatpush2.msra.mxu0 0.0
        %1391 = vmatprep.subr.mxu0 0.0
        %1392 = vmatpush2.msra.mxu0 0.0
        %1393 = vmatprep.mubr.f32.mxu0 0.0
        %1394 = vmatmul.mubr.f32.gmra.mxu0 %v1098
        %v1395 = vpop.f32.mrf.mxu0
        %v1396 = vadd.f32 %v1228, %v1395
        %v1397 = vpop.f32.mrf.mxu0
        %v1398 = vadd.f32 %v1232, %v1397
        %1399 = vmatprep.mubr.f32.mxu0 0.0
        %1400 = vmatmul.mubr.f32.gmra.mxu0 %v1099
        %v1401 = vpop.f32.mrf.mxu0
        %v1402 = vadd.f32 %v1228, %v1401
        %v1403 = vpop.f32.mrf.mxu0
        %v1404 = vadd.f32 %v1232, %v1403
        %1405 = vdwg.mxu0
        %1406 = vmatprep.subr.mxu0 %v1214
        %1407 = vmatpush1.msra.mxu0 %v1213
        %1408 = vmatprep.subr.mxu0 %v1207
        %1409 = vmatpush1.msra.mxu0 %v1206
        %1410 = vmatprep.subr.mxu0 %v1200
        %1411 = vmatpush1.msra.mxu0 %v1199
        %1412 = vmatprep.subr.mxu0 %v1193
        %1413 = vmatpush1.msra.mxu0 %v1192
        %1414 = vmatprep.subr.mxu0 %v1186
        %1415 = vmatpush1.msra.mxu0 %v1185
        %1416 = vmatprep.subr.mxu0 %v1179
        %1417 = vmatpush1.msra.mxu0 %v1178
        %1418 = vmatprep.subr.mxu0 %v1172
        %1419 = vmatpush1.msra.mxu0 %v1171
        %1420 = vmatprep.subr.mxu0 %v1165
        %1421 = vmatpush1.msra.mxu0 %v1164
        %1422 = vmatprep.subr.mxu0 %v1158
        %1423 = vmatpush1.msra.mxu0 %v1157
        %1424 = vmatprep.subr.mxu0 %v1151
        %1425 = vmatpush1.msra.mxu0 %v1150
        %1426 = vmatprep.subr.mxu0 %v1144
        %1427 = vmatpush1.msra.mxu0 %v1143
        %1428 = vmatprep.subr.mxu0 %v1137
        %1429 = vmatpush1.msra.mxu0 %v1136
        %1430 = vmatprep.subr.mxu0 %v1130
        %1431 = vmatpush1.msra.mxu0 %v1129
        %1432 = vmatprep.subr.mxu0 %v1123
        %1433 = vmatpush1.msra.mxu0 %v1122
        %1434 = vmatprep.subr.mxu0 %v1116
        %1435 = vmatpush1.msra.mxu0 %v1115
        %1436 = vmatprep.subr.mxu0 %v1109
        %1437 = vmatpush1.msra.mxu0 %v1108
        %1438 = vmatprep.subr.mxu0 0.0
        %1439 = vmatpush2.msra.mxu0 0.0
        %1440 = vmatprep.subr.mxu0 0.0
        %1441 = vmatpush2.msra.mxu0 0.0
        %1442 = vmatprep.subr.mxu0 0.0
        %1443 = vmatpush2.msra.mxu0 0.0
        %1444 = vmatprep.subr.mxu0 0.0
        %1445 = vmatpush2.msra.mxu0 0.0
        %1446 = vmatprep.subr.mxu0 0.0
        %1447 = vmatpush2.msra.mxu0 0.0
        %1448 = vmatprep.subr.mxu0 0.0
        %1449 = vmatpush2.msra.mxu0 0.0
        %1450 = vmatprep.subr.mxu0 0.0
        %1451 = vmatpush2.msra.mxu0 0.0
        %1452 = vmatprep.subr.mxu0 0.0
        %1453 = vmatpush2.msra.mxu0 0.0
        %1454 = vmatprep.subr.mxu0 0.0
        %1455 = vmatpush2.msra.mxu0 0.0
        %1456 = vmatprep.subr.mxu0 0.0
        %1457 = vmatpush2.msra.mxu0 0.0
        %1458 = vmatprep.subr.mxu0 0.0
        %1459 = vmatpush2.msra.mxu0 0.0
        %1460 = vmatprep.subr.mxu0 0.0
        %1461 = vmatpush2.msra.mxu0 0.0
        %1462 = vmatprep.subr.mxu0 0.0
        %1463 = vmatpush2.msra.mxu0 0.0
        %1464 = vmatprep.subr.mxu0 0.0
        %1465 = vmatpush2.msra.mxu0 0.0
        %1466 = vmatprep.subr.mxu0 0.0
        %1467 = vmatpush2.msra.mxu0 0.0
        %1468 = vmatprep.subr.mxu0 0.0
        %1469 = vmatpush2.msra.mxu0 0.0
        %1470 = vmatprep.mubr.f32.mxu0 0.0
        %1471 = vmatmul.mubr.f32.gmra.mxu0 %v1098
        %v1472 = vpop.f32.mrf.mxu0
        %v1473 = vadd.f32 %v1236, %v1472
        %v1474 = vpop.f32.mrf.mxu0
        %v1475 = vadd.f32 %v1240, %v1474
        %1476 = vmatprep.mubr.f32.mxu0 0.0
        %1477 = vmatmul.mubr.f32.gmra.mxu0 %v1099
        %v1478 = vpop.f32.mrf.mxu0
        %v1479 = vadd.f32 %v1236, %v1478
        %v1480 = vpop.f32.mrf.mxu0
        %v1481 = vadd.f32 %v1240, %v1480
        %1482 = vdwg.mxu0
        %1483 = vmatprep.subr.mxu0 0.0
        %1484 = vmatpush1.msra.mxu0 %v1215
        %1485 = vmatprep.subr.mxu0 0.0
        %1486 = vmatpush1.msra.mxu0 %v1208
        %1487 = vmatprep.subr.mxu0 0.0
        %1488 = vmatpush1.msra.mxu0 %v1201
        %1489 = vmatprep.subr.mxu0 0.0
        %1490 = vmatpush1.msra.mxu0 %v1194
        %1491 = vmatprep.subr.mxu0 0.0
        %1492 = vmatpush1.msra.mxu0 %v1187
        %1493 = vmatprep.subr.mxu0 0.0
        %1494 = vmatpush1.msra.mxu0 %v1180
        %1495 = vmatprep.subr.mxu0 0.0
        %1496 = vmatpush1.msra.mxu0 %v1173
        %1497 = vmatprep.subr.mxu0 0.0
        %1498 = vmatpush1.msra.mxu0 %v1166
        %1499 = vmatprep.subr.mxu0 0.0
        %1500 = vmatpush1.msra.mxu0 %v1159
        %1501 = vmatprep.subr.mxu0 0.0
        %1502 = vmatpush1.msra.mxu0 %v1152
        %1503 = vmatprep.subr.mxu0 0.0
        %1504 = vmatpush1.msra.mxu0 %v1145
        %1505 = vmatprep.subr.mxu0 0.0
        %1506 = vmatpush1.msra.mxu0 %v1138
        %1507 = vmatprep.subr.mxu0 0.0
        %1508 = vmatpush1.msra.mxu0 %v1131
        %1509 = vmatprep.subr.mxu0 0.0
        %1510 = vmatpush1.msra.mxu0 %v1124
        %1511 = vmatprep.subr.mxu0 0.0
        %1512 = vmatpush1.msra.mxu0 %v1117
        %1513 = vmatprep.subr.mxu0 0.0
        %1514 = vmatpush1.msra.mxu0 %v1110
        %1515 = vmatprep.subr.mxu0 0.0
        %1516 = vmatpush2.msra.mxu0 0.0
        %1517 = vmatprep.subr.mxu0 0.0
        %1518 = vmatpush2.msra.mxu0 0.0
        %1519 = vmatprep.subr.mxu0 0.0
        %1520 = vmatpush2.msra.mxu0 0.0
        %1521 = vmatprep.subr.mxu0 0.0
        %1522 = vmatpush2.msra.mxu0 0.0
        %1523 = vmatprep.subr.mxu0 0.0
        %1524 = vmatpush2.msra.mxu0 0.0
        %1525 = vmatprep.subr.mxu0 0.0
        %1526 = vmatpush2.msra.mxu0 0.0
        %1527 = vmatprep.subr.mxu0 0.0
        %1528 = vmatpush2.msra.mxu0 0.0
        %1529 = vmatprep.subr.mxu0 0.0
        %1530 = vmatpush2.msra.mxu0 0.0
        %1531 = vmatprep.subr.mxu0 0.0
        %1532 = vmatpush2.msra.mxu0 0.0
        %1533 = vmatprep.subr.mxu0 0.0
        %1534 = vmatpush2.msra.mxu0 0.0
        %1535 = vmatprep.subr.mxu0 0.0
        %1536 = vmatpush2.msra.mxu0 0.0
        %1537 = vmatprep.subr.mxu0 0.0
        %1538 = vmatpush2.msra.mxu0 0.0
        %1539 = vmatprep.subr.mxu0 0.0
        %1540 = vmatpush2.msra.mxu0 0.0
        %1541 = vmatprep.subr.mxu0 0.0
        %1542 = vmatpush2.msra.mxu0 0.0
        %1543 = vmatprep.subr.mxu0 0.0
        %1544 = vmatpush2.msra.mxu0 0.0
        %1545 = vmatprep.subr.mxu0 0.0
        %1546 = vmatpush2.msra.mxu0 0.0
        %1547 = vmatprep.mubr.f32.mxu0 0.0
        %1548 = vmatmul.mubr.f32.gmra.mxu0 %v1098
        %v1549 = vpop.f32.mrf.mxu0
        %v1550 = vadd.f32 %v1244, %v1549
        %v1551 = vpop.f32.mrf.mxu0
        %1552 = vmatprep.mubr.f32.mxu0 0.0
        %1553 = vmatmul.mubr.f32.gmra.mxu0 %v1099
        %v1554 = vpop.f32.mrf.mxu0
        %v1555 = vadd.f32 %v1244, %v1554
        %v1556 = vpop.f32.mrf.mxu0
        %1557 = vdwg.mxu0
        %v1558 = vsub.f32 0.0, %v1319
        %v1559 = vsub.f32 0.0, %v1321
        %v1560 = vsub.f32 0.0, %v1396
        %v1561 = vsub.f32 0.0, %v1398
        %v1562 = vsub.f32 0.0, %v1473
        %v1563 = vsub.f32 0.0, %v1475
        %v1564 = vsub.f32 0.0, %v1550
        %v1565 = vsub.f32 0.0, %v1325
        %v1566 = vsub.f32 0.0, %v1327
        %v1567 = vsub.f32 0.0, %v1402
        %v1568 = vsub.f32 0.0, %v1404
        %v1569 = vsub.f32 0.0, %v1479
        %v1570 = vsub.f32 0.0, %v1481
        %v1571 = vsub.f32 0.0, %v1555
        %v1572 = vmul.f32 %v1558, 1.442695
        %v1573 = vpow.pop %v1572
        %v1574 = vmul.f32 %v1559, 1.442695
        %v1575 = vpow.pop %v1574
        %v1576 = vmul.f32 %v1560, 1.442695
        %v1577 = vpow.pop %v1576
        %v1578 = vmul.f32 %v1561, 1.442695
        %v1579 = vpow.pop %v1578
        %v1580 = vmul.f32 %v1562, 1.442695
        %v1581 = vpow.pop %v1580
        %v1582 = vmul.f32 %v1563, 1.442695
        %v1583 = vpow.pop %v1582
        %v1584 = vmul.f32 %v1564, 1.442695
        %v1585 = vpow.pop %v1584
        %v1586 = vmul.f32 %v1565, 1.442695
        %v1587 = vpow.pop %v1586
        %v1588 = vmul.f32 %v1566, 1.442695
        %v1589 = vpow.pop %v1588
        %v1590 = vmul.f32 %v1567, 1.442695
        %v1591 = vpow.pop %v1590
        %v1592 = vmul.f32 %v1568, 1.442695
        %v1593 = vpow.pop %v1592
        %v1594 = vmul.f32 %v1569, 1.442695
        %v1595 = vpow.pop %v1594
        %v1596 = vmul.f32 %v1570, 1.442695
        %v1597 = vpow.pop %v1596
        %v1598 = vmul.f32 %v1571, 1.442695
        %v1599 = vpow.pop %v1598
        %v1600 = vadd.f32 %v1573, 1.0
        %v1601 = vadd.f32 %v1575, 1.0
        %v1602 = vadd.f32 %v1577, 1.0
        %v1603 = vadd.f32 %v1579, 1.0
        %v1604 = vadd.f32 %v1581, 1.0
        %v1605 = vadd.f32 %v1583, 1.0
        %v1606 = vadd.f32 %v1585, 1.0
        %v1607 = vadd.f32 %v1587, 1.0
        %v1608 = vadd.f32 %v1589, 1.0
        %v1609 = vadd.f32 %v1591, 1.0
        %v1610 = vadd.f32 %v1593, 1.0
        %v1611 = vadd.f32 %v1595, 1.0
        %v1612 = vadd.f32 %v1597, 1.0
        %v1613 = vadd.f32 %v1599, 1.0
        %v1614 = vrcp.pop %v1600
        %v1615 = vrcp.pop %v1601
        %v1616 = vrcp.pop %v1602
        %v1617 = vrcp.pop %v1603
        %v1618 = vrcp.pop %v1604
        %v1619 = vrcp.pop %v1605
        %v1620 = vrcp.pop %v1606
        %v1621 = vrcp.pop %v1607
        %v1622 = vrcp.pop %v1608
        %v1623 = vrcp.pop %v1609
        %v1624 = vrcp.pop %v1610
        %v1625 = vrcp.pop %v1611
        %v1626 = vrcp.pop %v1612
        %v1627 = vrcp.pop %v1613
        %1628 = vst [vmem:[%s301] sm:$0xff] %v1614
        %1629 = vst [vmem:[%s301 + $0x8] sm:$0xff] %v1615
        %1630 = vst [vmem:[%s301 + $0x10] sm:$0xff] %v1616
        %1631 = vst [vmem:[%s301 + $0x18] sm:$0xff] %v1617
        %1632 = vst [vmem:[%s301 + $0x20] sm:$0xff] %v1618
        %1633 = vst [vmem:[%s301 + $0x28] sm:$0xff] %v1619
        %1634 = vst.msk [vmem:[%s301 + $0x30] sm:$0xff] %vm423, %v1620
        %1635 = vst [vmem:[%s301 + $0x38] sm:$0xff] %v1621
        %1636 = vst [vmem:[%s301 + $0x40] sm:$0xff] %v1622
        %1637 = vst [vmem:[%s301 + $0x48] sm:$0xff] %v1623
        %1638 = vst [vmem:[%s301 + $0x50] sm:$0xff] %v1624
        %1639 = vst [vmem:[%s301 + $0x58] sm:$0xff] %v1625
        %1640 = vst [vmem:[%s301 + $0x60] sm:$0xff] %v1626
        %1641 = vst.msk [vmem:[%s301 + $0x68] sm:$0xff] %vm423, %v1627
        %s1642 = sand.u32 %s203, 1
        %s1643 = scalar_lea.sflag [#allocation3], %s1642
        %s1644 = sand.u32 %s203, 1
        %s1645 = smul.addr %s1644, 112
        %s1646 = scalar_lea.vmem [#allocation2], %s1645
        // Predicated region
        $region53: #{tpu_custom_call.1} parent=51 // pred_check
          %p1647 = pneg %p213
        $region54: #{tpu_custom_call.1} parent=51 // pred_check_branch
          %1649 = sbr.rel (%p1647) target = $region56
        $region55: #{tpu_custom_call.1} parent=51 // pred_region
          %s1650 = smul.u32 2, %s22
          %s1652 = ssub.s32 1792, 1792
          %1653 = vsyncadd %s1643, %s1652
          %s1654 = smul.addr %s1650, 7
          %s1655 = smul.addr %s1654, 128
          %s1656 = scalar_lea.hbm %s8, %s1655
          %s1657 = sshll.u32 %s1646, 4
          %s1658 = int_to_ptr.vmem [resolvable:$true] %s1657
          %1663 = dma.vmem_to_hbm [thread:$0]  %s1658, 1792, %s1656, %s1643, 896, 896, 56
        $region56: #{tpu_custom_call.1} parent=51 // pred_fallthru
          _
      $region52: #{tpu_custom_call.1} parent=5 // pred_fallthru
        _
      %p1664 = scmp.le.s32.totalorder 2, %s17
      // Predicated region
      $region57: #{tpu_custom_call.1} parent=5 // pred_check
        %p1665 = pneg %p1664
      $region58: #{tpu_custom_call.1} parent=5 // pred_check_branch
        %1667 = sbr.rel (%p1665) target = $region60
      $region59: #{tpu_custom_call.1} parent=5 // pred_region
        %s1668 = ssub.s32 %s17, 2
        // Predicated region
        $region61: #{tpu_custom_call.1} parent=59 // pred_check
          %p1669 = pneg %p219
        $region62: #{tpu_custom_call.1} parent=59 // pred_check_branch
          %1671 = sbr.rel (%p1669) target = $region64
        $region63: #{tpu_custom_call.1} parent=59 // pred_region
          %s1672 = sand.u32 %s204, 1
          %s1673 = scalar_lea.sflag [#allocation3], %s1672
          %s1674 = sand.u32 %s204, 1
          %s1675 = smul.addr %s1674, 112
          %s1676 = scalar_lea.vmem [#allocation2], %s1675
          %1677 = dma.done %s1673, 1792
        $region64: #{tpu_custom_call.1} parent=59 // pred_fallthru
          _
      $region60: #{tpu_custom_call.1} parent=5 // pred_fallthru
        _
    $region6: #{tpu_custom_call.1} parent=1 // loop_footer
      %s21 = sadd.s32 1, %s17
    $region7: #{tpu_custom_call.1} parent=1 // loop_footer_branch
      %16 = sbr.rel target = $region3
    $region8: #{tpu_custom_call.1} parent=1 // loop_exit
      _
    %1678 = vsyncpa [#allocation3], 1
    %s1679 = scalar_lea.sflag [#allocation3], 1
    %1680 = vsyncpa %s1679, 1

</llo_original>
